<compile_context>
chip_gen: v7x
topology: tpu7x:2x2x1
jax: 0.10.0
libtpu: 0.0.40
codegen_flags: <defaults>
</compile_context>

<pallas_src>
import jax
import jax.numpy as jnp
from jax.experimental import pallas as pl
from jax.experimental.pallas import tpu as pltpu

VOCAB = 251
VOCAB_PAD = 256      # pad 251 -> 256 (zero rows; real ids never hit the pad)
HIDDEN = 200
HIDDEN_PAD = 256     # pad 200 -> 256 lanes (zero weights / bias / fc2 row)
MAX_TILE_B = 256     # batch rows per grid step (multiple of 8)


def regression_kernel(ids_ref, emb_ref, w1_ref, b1_ref, w2_ref, b2_ref, o_ref):
    # ids_ref: (TB, L) int32 VMEM      emb_ref: (Vp, E) f32 (resident)
    # w1_ref:  (L*E, Hp) f32 (resident) b1_ref: (1, Hp) f32
    # w2_ref:  (1, Hp) f32 (fc2 weight as a row)   b2_ref: (1, 1) f32 SMEM
    # o_ref:   (TB, 1) f32
    TB, L = ids_ref.shape
    Vp, E = emb_ref.shape
    Hp = w1_ref.shape[1]

    lane_iota = jax.lax.broadcasted_iota(jnp.int32, (TB, Vp), 1)

    h = jnp.zeros((TB, Hp), dtype=jnp.float32)
    for l in range(L):                                    # static unroll (L small)
        tok = ids_ref[:, l:l + 1]                         # (TB, 1) int32
        onehot = (lane_iota == tok).astype(jnp.float32)   # (TB, Vp) fused "gather"
        x_l = jnp.dot(onehot, emb_ref[...],
                      preferred_element_type=jnp.float32)             # (TB, E)
        h = h + jnp.dot(x_l, w1_ref[l * E:(l + 1) * E, :],
                        preferred_element_type=jnp.float32)           # (TB, Hp)
    h = h + b1_ref[...]

    # fc2: dot with a single output column -> VPU multiply + lane reduction.
    y = jnp.sum(h * w2_ref[...], axis=-1, keepdims=True) + b2_ref[0, 0]
    o_ref[...] = jax.nn.sigmoid(y) * 9.0 + 1.0


def pack_params(emb, w1, b1, w2, b2):
    """One-time layout prep: pad vocab/hidden to dense lane tiles, fc2 weight as a row."""
    V, E = emb.shape
    F, H = w1.shape
    emb_p = jnp.zeros((VOCAB_PAD, E), jnp.float32).at[:V, :].set(emb)
    w1_p = jnp.zeros((F, HIDDEN_PAD), jnp.float32).at[:, :H].set(w1)
    b1_p = jnp.zeros((1, HIDDEN_PAD), jnp.float32).at[0, :H].set(b1)
    w2_p = jnp.zeros((1, HIDDEN_PAD), jnp.float32).at[0, :H].set(w2[:, 0])
    b2_p = jnp.asarray(b2, jnp.float32).reshape(1, 1)
    return emb_p, w1_p, b1_p, w2_p, b2_p


def regression_forward(ids, emb_p, w1_p, b1_p, w2_p, b2_p):
    """ids: (B, L) int32; returns (B, 1) float32. Whole forward = one pallas_call."""
    B, L = ids.shape
    Vp, E = emb_p.shape
    F, Hp = w1_p.shape
    assert F == L * E

    TB = B if B <= MAX_TILE_B else MAX_TILE_B        # == B (legal) or multiple of 8
    grid = (pl.cdiv(B, TB),)

    flops = 2 * B * L * (Vp * E + E * Hp) + 3 * B * Hp
    bytes_accessed = 4 * (ids.size + emb_p.size + w1_p.size + b1_p.size +
                          w2_p.size + b2_p.size + B)

    return pl.pallas_call(
        regression_kernel,
        out_shape=jax.ShapeDtypeStruct((B, 1), jnp.float32),
        grid_spec=pltpu.PrefetchScalarGridSpec(
            num_scalar_prefetch=0,
            grid=grid,
            in_specs=[
                pl.BlockSpec((TB, L), lambda i: (i, 0)),    # token ids (per B tile)
                pl.BlockSpec((Vp, E), lambda i: (0, 0)),    # embedding table (resident)
                pl.BlockSpec((F, Hp), lambda i: (0, 0)),    # fc1 weight (resident)
                pl.BlockSpec((1, Hp), lambda i: (0, 0)),    # fc1 bias
                pl.BlockSpec((1, Hp), lambda i: (0, 0)),    # fc2 weight as a row
                pl.BlockSpec(memory_space=pltpu.MemorySpace.SMEM),  # fc2 bias scalar
            ],
            out_specs=pl.BlockSpec((TB, 1), lambda i: (i, 0)),
        ),
        compiler_params=pltpu.CompilerParams(
            dimension_semantics=("parallel",)),
        cost_estimate=pl.CostEstimate(
            flops=flops, transcendentals=B, bytes_accessed=bytes_accessed),
    )(ids, emb_p, w1_p, b1_p, w2_p, b2_p)


def init_params(key, embedding_dim, max_length, hidden=HIDDEN, vocab=VOCAB):
    """Deterministic parameter init matching the module's shapes
    (Embedding ~ N(0,1); Linear ~ U(-1/sqrt(fan_in), 1/sqrt(fan_in)) like PyTorch)."""
    k_emb, k_w1, k_b1, k_w2, k_b2 = jax.random.split(key, 5)
    F = max_length * embedding_dim
    emb = jax.random.normal(k_emb, (vocab, embedding_dim), dtype=jnp.float32)
    lim1 = 1.0 / jnp.sqrt(F)
    w1 = jax.random.uniform(k_w1, (F, hidden), jnp.float32, -lim1, lim1)
    b1 = jax.random.uniform(k_b1, (hidden,), jnp.float32, -lim1, lim1)
    lim2 = 1.0 / jnp.sqrt(hidden)
    w2 = jax.random.uniform(k_w2, (hidden, 1), jnp.float32, -lim2, lim2)
    b2 = jax.random.uniform(k_b2, (1,), jnp.float32, -lim2, lim2)
    return emb, w1, b1, w2, b2


def reference_forward(ids, emb_table, w1, b1, w2, b2):
    B = ids.shape[0]
    x = jnp.take(emb_table, ids, axis=0).reshape(B, -1)
    h = x @ w1 + b1
    return jax.nn.sigmoid(h @ w2 + b2) * 9.0 + 1.0


if __name__ == "__main__":
    embedding_dim = 32
    max_length = 8
    batch = 2

    key = jax.random.PRNGKey(0)
    k_params, k_data = jax.random.split(key)
    emb, w1, b1, w2, b2 = init_params(k_params, embedding_dim, max_length)
    ids = jax.random.randint(k_data, (batch, max_length), 0, VOCAB, dtype=jnp.int32)

    packed = pack_params(emb, w1, b1, w2, b2)        # one-time weight layout prep
    fwd = jax.jit(regression_forward)                # single dispatch: one pallas_call

    out = jax.block_until_ready(fwd(ids, *packed))

    ref = reference_forward(ids, emb, w1, b1, w2, b2)
    assert out.shape == (batch, 1)
    assert jnp.allclose(out, ref, atol=1e-4, rtol=1e-4)
    print("KERNEL_OK")
</pallas_src>

<mosaic_0001>
module attributes {stable_mosaic.version = 11 : i64} {
  func.func @regression_kernel(%arg0: i32, %arg1: memref<2x8xi32, #tpu.memory_space<vmem>>, %arg2: memref<256x32xf32, #tpu.memory_space<vmem>>, %arg3: memref<256x256xf32, #tpu.memory_space<vmem>>, %arg4: memref<1x256xf32, #tpu.memory_space<vmem>>, %arg5: memref<1x256xf32, #tpu.memory_space<vmem>>, %arg6: memref<1x1xf32, #tpu.memory_space<smem>>, %arg7: memref<2x1xf32, #tpu.memory_space<vmem>>) attributes {dimension_semantics = [#tpu.dimension_semantics<parallel>], iteration_bounds = array<i64: 1>, scalar_prefetch = 0 : i64, scratch_operands = 0 : i64, tpu.core_type = #tpu.core_type<tc>, window_params = [{transform_indices = @transform_0, window_bounds = array<i64: 2, 8>}, {pipeline_mode = #tpu.pipeline_mode<synchronous>, transform_indices = @transform_1, window_bounds = array<i64: 256, 32>}, {pipeline_mode = #tpu.pipeline_mode<synchronous>, transform_indices = @transform_2, window_bounds = array<i64: 256, 256>}, {pipeline_mode = #tpu.pipeline_mode<synchronous>, transform_indices = @transform_3, window_bounds = array<i64: 1, 256>}, {pipeline_mode = #tpu.pipeline_mode<synchronous>, transform_indices = @transform_4, window_bounds = array<i64: 1, 256>}, {transform_indices = @transform_5, window_bounds = array<i64: 1, 1>}, {transform_indices = @transform_6, window_bounds = array<i64: 2, 1>}]} {
    %0 = tpu.iota {dimensions = array<i32: 1>} : vector<2x256xi32>
    %cst = arith.constant 0.000000e+00 : f32
    %1 = vector.broadcast %cst : f32 to vector<2x256xf32>
    %c0 = arith.constant 0 : index
    %c0_0 = arith.constant 0 : index
    %2 = vector.load %arg1[%c0, %c0_0] : memref<2x8xi32, #tpu.memory_space<vmem>>, vector<2x1xi32>
    %3 = vector.broadcast %2 : vector<2x1xi32> to vector<2x256xi32>
    %4 = arith.cmpi eq, %0, %3 : vector<2x256xi32>
    %5 = arith.extui %4 : vector<2x256xi1> to vector<2x256xi32>
    %6 = arith.sitofp %5 : vector<2x256xi32> to vector<2x256xf32>
    %c0_1 = arith.constant 0 : index
    %c0_2 = arith.constant 0 : index
    %7 = vector.load %arg2[%c0_1, %c0_2] : memref<256x32xf32, #tpu.memory_space<vmem>>, vector<256x32xf32>
    %cst_3 = arith.constant dense<0.000000e+00> : vector<2x32xf32>
    %8 = tpu.matmul %6, %7, %cst_3 {dimension_numbers = #tpu.dot_dimension_numbers<[1], [0], [0], [1], [0, 0, 1, 1], [], []>} : vector<2x256xf32>, vector<256x32xf32>, vector<2x32xf32> -> vector<2x32xf32>
    %c0_4 = arith.constant 0 : index
    %c0_5 = arith.constant 0 : index
    %9 = vector.load %arg3[%c0_4, %c0_5] : memref<256x256xf32, #tpu.memory_space<vmem>>, vector<32x256xf32>
    %cst_6 = arith.constant dense<0.000000e+00> : vector<2x256xf32>
    %10 = tpu.matmul %8, %9, %cst_6 {dimension_numbers = #tpu.dot_dimension_numbers<[1], [0], [0], [1], [0, 0, 1, 1], [], []>} : vector<2x32xf32>, vector<32x256xf32>, vector<2x256xf32> -> vector<2x256xf32>
    %11 = arith.addf %1, %10 : vector<2x256xf32>
    %c0_7 = arith.constant 0 : index
    %c1 = arith.constant 1 : index
    %12 = vector.load %arg1[%c0_7, %c1] : memref<2x8xi32, #tpu.memory_space<vmem>>, vector<2x1xi32>
    %13 = vector.broadcast %12 : vector<2x1xi32> to vector<2x256xi32>
    %14 = arith.cmpi eq, %0, %13 : vector<2x256xi32>
    %15 = arith.extui %14 : vector<2x256xi1> to vector<2x256xi32>
    %16 = arith.sitofp %15 : vector<2x256xi32> to vector<2x256xf32>
    %c0_8 = arith.constant 0 : index
    %c0_9 = arith.constant 0 : index
    %17 = vector.load %arg2[%c0_8, %c0_9] : memref<256x32xf32, #tpu.memory_space<vmem>>, vector<256x32xf32>
    %cst_10 = arith.constant dense<0.000000e+00> : vector<2x32xf32>
    %18 = tpu.matmul %16, %17, %cst_10 {dimension_numbers = #tpu.dot_dimension_numbers<[1], [0], [0], [1], [0, 0, 1, 1], [], []>} : vector<2x256xf32>, vector<256x32xf32>, vector<2x32xf32> -> vector<2x32xf32>
    %c32 = arith.constant 32 : index
    %c0_11 = arith.constant 0 : index
    %19 = vector.load %arg3[%c32, %c0_11] : memref<256x256xf32, #tpu.memory_space<vmem>>, vector<32x256xf32>
    %cst_12 = arith.constant dense<0.000000e+00> : vector<2x256xf32>
    %20 = tpu.matmul %18, %19, %cst_12 {dimension_numbers = #tpu.dot_dimension_numbers<[1], [0], [0], [1], [0, 0, 1, 1], [], []>} : vector<2x32xf32>, vector<32x256xf32>, vector<2x256xf32> -> vector<2x256xf32>
    %21 = arith.addf %11, %20 : vector<2x256xf32>
    %c0_13 = arith.constant 0 : index
    %c2 = arith.constant 2 : index
    %22 = vector.load %arg1[%c0_13, %c2] : memref<2x8xi32, #tpu.memory_space<vmem>>, vector<2x1xi32>
    %23 = vector.broadcast %22 : vector<2x1xi32> to vector<2x256xi32>
    %24 = arith.cmpi eq, %0, %23 : vector<2x256xi32>
    %25 = arith.extui %24 : vector<2x256xi1> to vector<2x256xi32>
    %26 = arith.sitofp %25 : vector<2x256xi32> to vector<2x256xf32>
    %c0_14 = arith.constant 0 : index
    %c0_15 = arith.constant 0 : index
    %27 = vector.load %arg2[%c0_14, %c0_15] : memref<256x32xf32, #tpu.memory_space<vmem>>, vector<256x32xf32>
    %cst_16 = arith.constant dense<0.000000e+00> : vector<2x32xf32>
    %28 = tpu.matmul %26, %27, %cst_16 {dimension_numbers = #tpu.dot_dimension_numbers<[1], [0], [0], [1], [0, 0, 1, 1], [], []>} : vector<2x256xf32>, vector<256x32xf32>, vector<2x32xf32> -> vector<2x32xf32>
    %c64 = arith.constant 64 : index
    %c0_17 = arith.constant 0 : index
    %29 = vector.load %arg3[%c64, %c0_17] : memref<256x256xf32, #tpu.memory_space<vmem>>, vector<32x256xf32>
    %cst_18 = arith.constant dense<0.000000e+00> : vector<2x256xf32>
    %30 = tpu.matmul %28, %29, %cst_18 {dimension_numbers = #tpu.dot_dimension_numbers<[1], [0], [0], [1], [0, 0, 1, 1], [], []>} : vector<2x32xf32>, vector<32x256xf32>, vector<2x256xf32> -> vector<2x256xf32>
    %31 = arith.addf %21, %30 : vector<2x256xf32>
    %c0_19 = arith.constant 0 : index
    %c3 = arith.constant 3 : index
    %32 = vector.load %arg1[%c0_19, %c3] : memref<2x8xi32, #tpu.memory_space<vmem>>, vector<2x1xi32>
    %33 = vector.broadcast %32 : vector<2x1xi32> to vector<2x256xi32>
    %34 = arith.cmpi eq, %0, %33 : vector<2x256xi32>
    %35 = arith.extui %34 : vector<2x256xi1> to vector<2x256xi32>
    %36 = arith.sitofp %35 : vector<2x256xi32> to vector<2x256xf32>
    %c0_20 = arith.constant 0 : index
    %c0_21 = arith.constant 0 : index
    %37 = vector.load %arg2[%c0_20, %c0_21] : memref<256x32xf32, #tpu.memory_space<vmem>>, vector<256x32xf32>
    %cst_22 = arith.constant dense<0.000000e+00> : vector<2x32xf32>
    %38 = tpu.matmul %36, %37, %cst_22 {dimension_numbers = #tpu.dot_dimension_numbers<[1], [0], [0], [1], [0, 0, 1, 1], [], []>} : vector<2x256xf32>, vector<256x32xf32>, vector<2x32xf32> -> vector<2x32xf32>
    %c96 = arith.constant 96 : index
    %c0_23 = arith.constant 0 : index
    %39 = vector.load %arg3[%c96, %c0_23] : memref<256x256xf32, #tpu.memory_space<vmem>>, vector<32x256xf32>
    %cst_24 = arith.constant dense<0.000000e+00> : vector<2x256xf32>
    %40 = tpu.matmul %38, %39, %cst_24 {dimension_numbers = #tpu.dot_dimension_numbers<[1], [0], [0], [1], [0, 0, 1, 1], [], []>} : vector<2x32xf32>, vector<32x256xf32>, vector<2x256xf32> -> vector<2x256xf32>
    %41 = arith.addf %31, %40 : vector<2x256xf32>
    %c0_25 = arith.constant 0 : index
    %c4 = arith.constant 4 : index
    %42 = vector.load %arg1[%c0_25, %c4] : memref<2x8xi32, #tpu.memory_space<vmem>>, vector<2x1xi32>
    %43 = vector.broadcast %42 : vector<2x1xi32> to vector<2x256xi32>
    %44 = arith.cmpi eq, %0, %43 : vector<2x256xi32>
    %45 = arith.extui %44 : vector<2x256xi1> to vector<2x256xi32>
    %46 = arith.sitofp %45 : vector<2x256xi32> to vector<2x256xf32>
    %c0_26 = arith.constant 0 : index
    %c0_27 = arith.constant 0 : index
    %47 = vector.load %arg2[%c0_26, %c0_27] : memref<256x32xf32, #tpu.memory_space<vmem>>, vector<256x32xf32>
    %cst_28 = arith.constant dense<0.000000e+00> : vector<2x32xf32>
    %48 = tpu.matmul %46, %47, %cst_28 {dimension_numbers = #tpu.dot_dimension_numbers<[1], [0], [0], [1], [0, 0, 1, 1], [], []>} : vector<2x256xf32>, vector<256x32xf32>, vector<2x32xf32> -> vector<2x32xf32>
    %c128 = arith.constant 128 : index
    %c0_29 = arith.constant 0 : index
    %49 = vector.load %arg3[%c128, %c0_29] : memref<256x256xf32, #tpu.memory_space<vmem>>, vector<32x256xf32>
    %cst_30 = arith.constant dense<0.000000e+00> : vector<2x256xf32>
    %50 = tpu.matmul %48, %49, %cst_30 {dimension_numbers = #tpu.dot_dimension_numbers<[1], [0], [0], [1], [0, 0, 1, 1], [], []>} : vector<2x32xf32>, vector<32x256xf32>, vector<2x256xf32> -> vector<2x256xf32>
    %51 = arith.addf %41, %50 : vector<2x256xf32>
    %c0_31 = arith.constant 0 : index
    %c5 = arith.constant 5 : index
    %52 = vector.load %arg1[%c0_31, %c5] : memref<2x8xi32, #tpu.memory_space<vmem>>, vector<2x1xi32>
    %53 = vector.broadcast %52 : vector<2x1xi32> to vector<2x256xi32>
    %54 = arith.cmpi eq, %0, %53 : vector<2x256xi32>
    %55 = arith.extui %54 : vector<2x256xi1> to vector<2x256xi32>
    %56 = arith.sitofp %55 : vector<2x256xi32> to vector<2x256xf32>
    %c0_32 = arith.constant 0 : index
    %c0_33 = arith.constant 0 : index
    %57 = vector.load %arg2[%c0_32, %c0_33] : memref<256x32xf32, #tpu.memory_space<vmem>>, vector<256x32xf32>
    %cst_34 = arith.constant dense<0.000000e+00> : vector<2x32xf32>
    %58 = tpu.matmul %56, %57, %cst_34 {dimension_numbers = #tpu.dot_dimension_numbers<[1], [0], [0], [1], [0, 0, 1, 1], [], []>} : vector<2x256xf32>, vector<256x32xf32>, vector<2x32xf32> -> vector<2x32xf32>
    %c160 = arith.constant 160 : index
    %c0_35 = arith.constant 0 : index
    %59 = vector.load %arg3[%c160, %c0_35] : memref<256x256xf32, #tpu.memory_space<vmem>>, vector<32x256xf32>
    %cst_36 = arith.constant dense<0.000000e+00> : vector<2x256xf32>
    %60 = tpu.matmul %58, %59, %cst_36 {dimension_numbers = #tpu.dot_dimension_numbers<[1], [0], [0], [1], [0, 0, 1, 1], [], []>} : vector<2x32xf32>, vector<32x256xf32>, vector<2x256xf32> -> vector<2x256xf32>
    %61 = arith.addf %51, %60 : vector<2x256xf32>
    %c0_37 = arith.constant 0 : index
    %c6 = arith.constant 6 : index
    %62 = vector.load %arg1[%c0_37, %c6] : memref<2x8xi32, #tpu.memory_space<vmem>>, vector<2x1xi32>
    %63 = vector.broadcast %62 : vector<2x1xi32> to vector<2x256xi32>
    %64 = arith.cmpi eq, %0, %63 : vector<2x256xi32>
    %65 = arith.extui %64 : vector<2x256xi1> to vector<2x256xi32>
    %66 = arith.sitofp %65 : vector<2x256xi32> to vector<2x256xf32>
    %c0_38 = arith.constant 0 : index
    %c0_39 = arith.constant 0 : index
    %67 = vector.load %arg2[%c0_38, %c0_39] : memref<256x32xf32, #tpu.memory_space<vmem>>, vector<256x32xf32>
    %cst_40 = arith.constant dense<0.000000e+00> : vector<2x32xf32>
    %68 = tpu.matmul %66, %67, %cst_40 {dimension_numbers = #tpu.dot_dimension_numbers<[1], [0], [0], [1], [0, 0, 1, 1], [], []>} : vector<2x256xf32>, vector<256x32xf32>, vector<2x32xf32> -> vector<2x32xf32>
    %c192 = arith.constant 192 : index
    %c0_41 = arith.constant 0 : index
    %69 = vector.load %arg3[%c192, %c0_41] : memref<256x256xf32, #tpu.memory_space<vmem>>, vector<32x256xf32>
    %cst_42 = arith.constant dense<0.000000e+00> : vector<2x256xf32>
    %70 = tpu.matmul %68, %69, %cst_42 {dimension_numbers = #tpu.dot_dimension_numbers<[1], [0], [0], [1], [0, 0, 1, 1], [], []>} : vector<2x32xf32>, vector<32x256xf32>, vector<2x256xf32> -> vector<2x256xf32>
    %71 = arith.addf %61, %70 : vector<2x256xf32>
    %c0_43 = arith.constant 0 : index
    %c7 = arith.constant 7 : index
    %72 = vector.load %arg1[%c0_43, %c7] : memref<2x8xi32, #tpu.memory_space<vmem>>, vector<2x1xi32>
    %73 = vector.broadcast %72 : vector<2x1xi32> to vector<2x256xi32>
    %74 = arith.cmpi eq, %0, %73 : vector<2x256xi32>
    %75 = arith.extui %74 : vector<2x256xi1> to vector<2x256xi32>
    %76 = arith.sitofp %75 : vector<2x256xi32> to vector<2x256xf32>
    %c0_44 = arith.constant 0 : index
    %c0_45 = arith.constant 0 : index
    %77 = vector.load %arg2[%c0_44, %c0_45] : memref<256x32xf32, #tpu.memory_space<vmem>>, vector<256x32xf32>
    %cst_46 = arith.constant dense<0.000000e+00> : vector<2x32xf32>
    %78 = tpu.matmul %76, %77, %cst_46 {dimension_numbers = #tpu.dot_dimension_numbers<[1], [0], [0], [1], [0, 0, 1, 1], [], []>} : vector<2x256xf32>, vector<256x32xf32>, vector<2x32xf32> -> vector<2x32xf32>
    %c224 = arith.constant 224 : index
    %c0_47 = arith.constant 0 : index
    %79 = vector.load %arg3[%c224, %c0_47] : memref<256x256xf32, #tpu.memory_space<vmem>>, vector<32x256xf32>
    %cst_48 = arith.constant dense<0.000000e+00> : vector<2x256xf32>
    %80 = tpu.matmul %78, %79, %cst_48 {dimension_numbers = #tpu.dot_dimension_numbers<[1], [0], [0], [1], [0, 0, 1, 1], [], []>} : vector<2x32xf32>, vector<32x256xf32>, vector<2x256xf32> -> vector<2x256xf32>
    %81 = arith.addf %71, %80 : vector<2x256xf32>
    %c0_49 = arith.constant 0 : index
    %c0_50 = arith.constant 0 : index
    %82 = vector.load %arg4[%c0_49, %c0_50] : memref<1x256xf32, #tpu.memory_space<vmem>>, vector<1x256xf32>
    %83 = vector.broadcast %82 : vector<1x256xf32> to vector<2x256xf32>
    %84 = arith.addf %81, %83 : vector<2x256xf32>
    %c0_51 = arith.constant 0 : index
    %c0_52 = arith.constant 0 : index
    %85 = vector.load %arg5[%c0_51, %c0_52] : memref<1x256xf32, #tpu.memory_space<vmem>>, vector<1x256xf32>
    %86 = vector.broadcast %85 : vector<1x256xf32> to vector<2x256xf32>
    %87 = arith.mulf %84, %86 : vector<2x256xf32>
    %cst_53 = arith.constant dense<0.000000e+00> : vector<2xf32>
    %88 = vector.multi_reduction <add>, %87, %cst_53 [1] : vector<2x256xf32> to vector<2xf32>
    %89 = vector.shape_cast %88 : vector<2xf32> to vector<2x1xf32>
    %c0_54 = arith.constant 0 : index
    %c0_55 = arith.constant 0 : index
    %90 = memref.load %arg6[%c0_54, %c0_55] : memref<1x1xf32, #tpu.memory_space<smem>>
    %91 = vector.broadcast %90 : f32 to vector<2x1xf32>
    %92 = arith.addf %89, %91 : vector<2x1xf32>
    %93 = arith.negf %92 : vector<2x1xf32>
    %94 = math.exp %93 : vector<2x1xf32>
    %cst_56 = arith.constant 1.000000e+00 : f32
    %95 = vector.broadcast %cst_56 : f32 to vector<2x1xf32>
    %96 = arith.addf %95, %94 : vector<2x1xf32>
    %97 = arith.divf %95, %96 : vector<2x1xf32>
    %cst_57 = arith.constant 9.000000e+00 : f32
    %98 = vector.broadcast %cst_57 : f32 to vector<2x1xf32>
    %99 = arith.mulf %97, %98 : vector<2x1xf32>
    %cst_58 = arith.constant 1.000000e+00 : f32
    %100 = vector.broadcast %cst_58 : f32 to vector<2x1xf32>
    %101 = arith.addf %99, %100 : vector<2x1xf32>
    %c0_59 = arith.constant 0 : index
    %c0_60 = arith.constant 0 : index
    %102 = vector.load %arg7[%c0_59, %c0_60] : memref<2x1xf32, #tpu.memory_space<vmem>>, vector<2x1xf32>
    tpu.vector_store %arg7[%c0_59, %c0_60], %101 {strides = array<i32>} : memref<2x1xf32, #tpu.memory_space<vmem>>, vector<2x1xf32>,
    return
  }
  func.func @transform_0(%arg0: i32) -> (i32, i32) {
    %c0_i32 = arith.constant 0 : i32
    %c0_i32_0 = arith.constant 0 : i32
    return %arg0, %c0_i32 : i32, i32
  }
  func.func @transform_1(%arg0: i32) -> (i32, i32) {
    %c0_i32 = arith.constant 0 : i32
    %c0_i32_0 = arith.constant 0 : i32
    %c0_i32_1 = arith.constant 0 : i32
    return %c0_i32, %c0_i32_0 : i32, i32
  }
  func.func @transform_2(%arg0: i32) -> (i32, i32) {
    %c0_i32 = arith.constant 0 : i32
    %c0_i32_0 = arith.constant 0 : i32
    %c0_i32_1 = arith.constant 0 : i32
    return %c0_i32, %c0_i32_0 : i32, i32
  }
  func.func @transform_3(%arg0: i32) -> (i32, i32) {
    %c0_i32 = arith.constant 0 : i32
    %c0_i32_0 = arith.constant 0 : i32
    %c0_i32_1 = arith.constant 0 : i32
    return %c0_i32, %c0_i32_0 : i32, i32
  }
  func.func @transform_4(%arg0: i32) -> (i32, i32) {
    %c0_i32 = arith.constant 0 : i32
    %c0_i32_0 = arith.constant 0 : i32
    %c0_i32_1 = arith.constant 0 : i32
    return %c0_i32, %c0_i32_0 : i32, i32
  }
  func.func @transform_5(%arg0: i32) -> (i32, i32) {
    %c0_i32 = arith.constant 0 : i32
    %c0_i32_0 = arith.constant 0 : i32
    %c0_i32_1 = arith.constant 0 : i32
    return %c0_i32, %c0_i32_0 : i32, i32
  }
  func.func @transform_6(%arg0: i32) -> (i32, i32) {
    %c0_i32 = arith.constant 0 : i32
    %c0_i32_0 = arith.constant 0 : i32
    return %arg0, %c0_i32 : i32, i32
  }
}

</mosaic_0001>

<llo_original>
// kernel: regression_forward.1
$region0: #{regression_forward.1}
  #allocation0 [shape = 'u32[]', space=smem, size = 0x4, offset = 0x4, fixed_abs, tag = 'smem constant byte address 0x4 - core index']
  #allocation1 [shape = 'u32[144,128]{1,0:T(1,128)}', space=vmem, size = 0x12000, scoped, tag = 'internal scratch']
  #allocation2 [shape = 'f32[1,1]{1,0:T(1,128)S(6)}', space=smem, size = 0x200, scoped, tag = 'scoped memory for regression_forward.1']
  %s0 = inlined_call_operand.vmem [shape: s32[2,8], index: 0, kind: input, shape index: {}]
  %s1 = inlined_call_operand.vmem [shape: f32[256,32], index: 1, kind: input, shape index: {}]
  %s2 = inlined_call_operand.hbm [shape: f32[256,256], index: 2, kind: input, shape index: {}]
  %s3 = inlined_call_operand.vmem [shape: f32[1,256], index: 3, kind: input, shape index: {}]
  %s4 = inlined_call_operand.vmem [shape: f32[1,256], index: 4, kind: input, shape index: {}]
  %s5 = inlined_call_operand.<no memory space> [shape: f32[1,1], index: 5, kind: input, shape index: {}]
  %s6 = inlined_call_operand.vmem [shape: f32[2,1], index: 6, kind: output, shape index: {}]
  %s7 = sld [smem:[#allocation0]]
  $region38: #{regression_forward.1} parent=0
    _
  %s9 = ssub.s32 1, %s7
  %s10 = scalar_select 0, %s9, %s7
  %11 = sst [smem:[#allocation2]] %s5
  $region1: #{regression_forward.1} parent=0
    #allocation3 [shape = 'u8[262144]{0}', space=vmem, size = 0x40000, scoped, tag = 'input window, operand 2, single buffered']
    #allocation4 [shape = 's32[1]{0}', space=sflag, size = 0x4, scoped, tag = 'scoped memory for regression_forward.1']
    %12 = vsyncpa [#allocation4], 0
    // Predicated region
    $region2: #{regression_forward.1} parent=1 // pred_check
      _
    $region3: #{regression_forward.1} parent=1 // pred_check_branch
      %14 = sbr.rel (0) target = $region5
    $region4: #{regression_forward.1} parent=1 // pred_region
      _
    $region5: #{regression_forward.1} parent=1 // pred_fallthru
      _
    // Predicated region
    $region6: #{regression_forward.1} parent=1 // pred_check
      _
    $region7: #{regression_forward.1} parent=1 // pred_check_branch
      %16 = sbr.rel (0) target = $region9
    $region8: #{regression_forward.1} parent=1 // pred_region
      _
    $region9: #{regression_forward.1} parent=1 // pred_fallthru
      _
    // Predicated region
    $region10: #{regression_forward.1} parent=1 // pred_check
      _
    $region11: #{regression_forward.1} parent=1 // pred_check_branch
      %18 = sbr.rel (0) target = $region13
    $region12: #{regression_forward.1} parent=1 // pred_region
      %s20 = ssub.s32 8192, 8192
      %21 = vsyncadd [#allocation4], %s20
      %s22 = sshll.u32 [#allocation3], 4
      %s23 = int_to_ptr.vmem [resolvable:$true] %s22
      %28 = dma.hbm_to_vmem [thread:$0]  %s2, 8192, %s23, [#allocation4], 256, 256, 16
    $region13: #{regression_forward.1} parent=1 // pred_fallthru
      _
    // Predicated region
    $region14: #{regression_forward.1} parent=1 // pred_check
      _
    $region15: #{regression_forward.1} parent=1 // pred_check_branch
      %30 = sbr.rel (0) target = $region17
    $region16: #{regression_forward.1} parent=1 // pred_region
      _
    $region17: #{regression_forward.1} parent=1 // pred_fallthru
      _
    // Predicated region
    $region18: #{regression_forward.1} parent=1 // pred_check
      _
    $region19: #{regression_forward.1} parent=1 // pred_check_branch
      %32 = sbr.rel (0) target = $region21
    $region20: #{regression_forward.1} parent=1 // pred_region
      _
    $region21: #{regression_forward.1} parent=1 // pred_fallthru
      _
    // Predicated region
    $region22: #{regression_forward.1} parent=1 // pred_check
      _
    $region23: #{regression_forward.1} parent=1 // pred_check_branch
      %34 = sbr.rel (0) target = $region25
    $region24: #{regression_forward.1} parent=1 // pred_region
      _
    $region25: #{regression_forward.1} parent=1 // pred_fallthru
      _
    // Predicated region
    $region26: #{regression_forward.1} parent=1 // pred_check
      _
    $region27: #{regression_forward.1} parent=1 // pred_check_branch
      %36 = sbr.rel (0) target = $region29
    $region28: #{regression_forward.1} parent=1 // pred_region
      %37 = dma.done [#allocation4], 8192
    $region29: #{regression_forward.1} parent=1 // pred_fallthru
      _
    %v38 = vlaneseq
    %v39 = vand.u32 %v38, 127
    %v40 = vadd.s32 %v39, 128
    %v41 = vld [vmem:[%s0] sm:$0x3]
    %42 = vset.pattern.permute.xlu0 0
    %43 = vperm.xlu0 %42, %v41
    %v44 = vpop.permute.xlu0 %43
    %vm45 = vcmp.eq.s32.totalorder %v39, %v44
    %vm46 = vcmp.eq.s32.totalorder %v40, %v44
    %v47 = vsel %vm45, 1, 0
    %v48 = vsel %vm46, 1, 0
    %v49 = vcvt.s32.f32 %v47
    %v50 = vcvt.s32.f32 %v48
    %v51 = vld [vmem:[%s1] sm:$0xff]
    %v52 = vld [vmem:[%s1 + $0x8] sm:$0xff]
    %v53 = vld [vmem:[%s1 + $0x10] sm:$0xff]
    %v54 = vld [vmem:[%s1 + $0x18] sm:$0xff]
    %v55 = vld [vmem:[%s1 + $0x20] sm:$0xff]
    %v56 = vld [vmem:[%s1 + $0x28] sm:$0xff]
    %v57 = vld [vmem:[%s1 + $0x30] sm:$0xff]
    %v58 = vld [vmem:[%s1 + $0x38] sm:$0xff]
    %v59 = vld [vmem:[%s1 + $0x40] sm:$0xff]
    %v60 = vld [vmem:[%s1 + $0x48] sm:$0xff]
    %v61 = vld [vmem:[%s1 + $0x50] sm:$0xff]
    %v62 = vld [vmem:[%s1 + $0x58] sm:$0xff]
    %v63 = vld [vmem:[%s1 + $0x60] sm:$0xff]
    %v64 = vld [vmem:[%s1 + $0x68] sm:$0xff]
    %v65 = vld [vmem:[%s1 + $0x70] sm:$0xff]
    %v66 = vld [vmem:[%s1 + $0x78] sm:$0xff]
    %v67 = vld [vmem:[%s1 + $0x80] sm:$0xff]
    %v68 = vld [vmem:[%s1 + $0x88] sm:$0xff]
    %v69 = vld [vmem:[%s1 + $0x90] sm:$0xff]
    %v70 = vld [vmem:[%s1 + $0x98] sm:$0xff]
    %v71 = vld [vmem:[%s1 + $0xa0] sm:$0xff]
    %v72 = vld [vmem:[%s1 + $0xa8] sm:$0xff]
    %v73 = vld [vmem:[%s1 + $0xb0] sm:$0xff]
    %v74 = vld [vmem:[%s1 + $0xb8] sm:$0xff]
    %v75 = vld [vmem:[%s1 + $0xc0] sm:$0xff]
    %v76 = vld [vmem:[%s1 + $0xc8] sm:$0xff]
    %v77 = vld [vmem:[%s1 + $0xd0] sm:$0xff]
    %v78 = vld [vmem:[%s1 + $0xd8] sm:$0xff]
    %v79 = vld [vmem:[%s1 + $0xe0] sm:$0xff]
    %v80 = vld [vmem:[%s1 + $0xe8] sm:$0xff]
    %v81 = vld [vmem:[%s1 + $0xf0] sm:$0xff]
    %v82 = vld [vmem:[%s1 + $0xf8] sm:$0xff]
    %83 = vmatprep.subr.mxu0 0.0
    %84 = vmatpush1.msra.mxu0 %v51
    %85 = vmatprep.subr.mxu0 0.0
    %86 = vmatpush1.msra.mxu0 %v52
    %87 = vmatprep.subr.mxu0 0.0
    %88 = vmatpush1.msra.mxu0 %v53
    %89 = vmatprep.subr.mxu0 0.0
    %90 = vmatpush1.msra.mxu0 %v54
    %91 = vmatprep.subr.mxu0 0.0
    %92 = vmatpush1.msra.mxu0 %v55
    %93 = vmatprep.subr.mxu0 0.0
    %94 = vmatpush1.msra.mxu0 %v56
    %95 = vmatprep.subr.mxu0 0.0
    %96 = vmatpush1.msra.mxu0 %v57
    %97 = vmatprep.subr.mxu0 0.0
    %98 = vmatpush1.msra.mxu0 %v58
    %99 = vmatprep.subr.mxu0 0.0
    %100 = vmatpush1.msra.mxu0 %v59
    %101 = vmatprep.subr.mxu0 0.0
    %102 = vmatpush1.msra.mxu0 %v60
    %103 = vmatprep.subr.mxu0 0.0
    %104 = vmatpush1.msra.mxu0 %v61
    %105 = vmatprep.subr.mxu0 0.0
    %106 = vmatpush1.msra.mxu0 %v62
    %107 = vmatprep.subr.mxu0 0.0
    %108 = vmatpush1.msra.mxu0 %v63
    %109 = vmatprep.subr.mxu0 0.0
    %110 = vmatpush1.msra.mxu0 %v64
    %111 = vmatprep.subr.mxu0 0.0
    %112 = vmatpush1.msra.mxu0 %v65
    %113 = vmatprep.subr.mxu0 0.0
    %114 = vmatpush1.msra.mxu0 %v66
    %115 = vmatprep.subr.mxu0 0.0
    %116 = vmatpush1.msra.mxu0 %v67
    %117 = vmatprep.subr.mxu0 0.0
    %118 = vmatpush1.msra.mxu0 %v68
    %119 = vmatprep.subr.mxu0 0.0
    %120 = vmatpush1.msra.mxu0 %v69
    %121 = vmatprep.subr.mxu0 0.0
    %122 = vmatpush1.msra.mxu0 %v70
    %123 = vmatprep.subr.mxu0 0.0
    %124 = vmatpush1.msra.mxu0 %v71
    %125 = vmatprep.subr.mxu0 0.0
    %126 = vmatpush1.msra.mxu0 %v72
    %127 = vmatprep.subr.mxu0 0.0
    %128 = vmatpush1.msra.mxu0 %v73
    %129 = vmatprep.subr.mxu0 0.0
    %130 = vmatpush1.msra.mxu0 %v74
    %131 = vmatprep.subr.mxu0 0.0
    %132 = vmatpush1.msra.mxu0 %v75
    %133 = vmatprep.subr.mxu0 0.0
    %134 = vmatpush1.msra.mxu0 %v76
    %135 = vmatprep.subr.mxu0 0.0
    %136 = vmatpush1.msra.mxu0 %v77
    %137 = vmatprep.subr.mxu0 0.0
    %138 = vmatpush1.msra.mxu0 %v78
    %139 = vmatprep.subr.mxu0 0.0
    %140 = vmatpush1.msra.mxu0 %v79
    %141 = vmatprep.subr.mxu0 0.0
    %142 = vmatpush1.msra.mxu0 %v80
    %143 = vmatprep.subr.mxu0 0.0
    %144 = vmatpush1.msra.mxu0 %v81
    %145 = vmatprep.subr.mxu0 0.0
    %146 = vmatpush1.msra.mxu0 %v82
    %147 = vmatprep.mubr.f32.mxu0 %v50
    %148 = vmatmul.mubr.f32.gmra.mrb[0].mxu0 %v49
    %v149 = vpop.f32.mrb[0].mxu0
    %v150 = vadd.f32 0.0, %v149
    %v151 = vpop.f32.mrb[0].mxu0
    %152 = vdwg.mxu0
    %v153 = vld [vmem:[#allocation3] sm:$0xff]
    %v154 = vld [vmem:[#allocation3 + $0x8] sm:$0xff]
    %v155 = vld [vmem:[#allocation3 + $0x10] sm:$0xff]
    %v156 = vld [vmem:[#allocation3 + $0x18] sm:$0xff]
    %v157 = vld [vmem:[#allocation3 + $0x20] sm:$0xff]
    %v158 = vld [vmem:[#allocation3 + $0x28] sm:$0xff]
    %v159 = vld [vmem:[#allocation3 + $0x30] sm:$0xff]
    %v160 = vld [vmem:[#allocation3 + $0x38] sm:$0xff]
    %161 = vset.pattern.permute.xlu0 1
    %162 = vperm.xlu0 %161, %v41
    %v163 = vpop.permute.xlu0 %162
    %vm164 = vcmp.eq.s32.totalorder %v39, %v163
    %vm165 = vcmp.eq.s32.totalorder %v40, %v163
    %v166 = vsel %vm164, 1, 0
    %v167 = vsel %vm165, 1, 0
    %v168 = vcvt.s32.f32 %v166
    %v169 = vcvt.s32.f32 %v167
    %170 = vmatprep.subr.mxu0 0.0
    %171 = vmatpush1.msra.mxu0 %v51
    %172 = vmatprep.subr.mxu0 0.0
    %173 = vmatpush1.msra.mxu0 %v52
    %174 = vmatprep.subr.mxu0 0.0
    %175 = vmatpush1.msra.mxu0 %v53
    %176 = vmatprep.subr.mxu0 0.0
    %177 = vmatpush1.msra.mxu0 %v54
    %178 = vmatprep.subr.mxu0 0.0
    %179 = vmatpush1.msra.mxu0 %v55
    %180 = vmatprep.subr.mxu0 0.0
    %181 = vmatpush1.msra.mxu0 %v56
    %182 = vmatprep.subr.mxu0 0.0
    %183 = vmatpush1.msra.mxu0 %v57
    %184 = vmatprep.subr.mxu0 0.0
    %185 = vmatpush1.msra.mxu0 %v58
    %186 = vmatprep.subr.mxu0 0.0
    %187 = vmatpush1.msra.mxu0 %v59
    %188 = vmatprep.subr.mxu0 0.0
    %189 = vmatpush1.msra.mxu0 %v60
    %190 = vmatprep.subr.mxu0 0.0
    %191 = vmatpush1.msra.mxu0 %v61
    %192 = vmatprep.subr.mxu0 0.0
    %193 = vmatpush1.msra.mxu0 %v62
    %194 = vmatprep.subr.mxu0 0.0
    %195 = vmatpush1.msra.mxu0 %v63
    %196 = vmatprep.subr.mxu0 0.0
    %197 = vmatpush1.msra.mxu0 %v64
    %198 = vmatprep.subr.mxu0 0.0
    %199 = vmatpush1.msra.mxu0 %v65
    %200 = vmatprep.subr.mxu0 0.0
    %201 = vmatpush1.msra.mxu0 %v66
    %202 = vmatprep.subr.mxu0 0.0
    %203 = vmatpush1.msra.mxu0 %v67
    %204 = vmatprep.subr.mxu0 0.0
    %205 = vmatpush1.msra.mxu0 %v68
    %206 = vmatprep.subr.mxu0 0.0
    %207 = vmatpush1.msra.mxu0 %v69
    %208 = vmatprep.subr.mxu0 0.0
    %209 = vmatpush1.msra.mxu0 %v70
    %210 = vmatprep.subr.mxu0 0.0
    %211 = vmatpush1.msra.mxu0 %v71
    %212 = vmatprep.subr.mxu0 0.0
    %213 = vmatpush1.msra.mxu0 %v72
    %214 = vmatprep.subr.mxu0 0.0
    %215 = vmatpush1.msra.mxu0 %v73
    %216 = vmatprep.subr.mxu0 0.0
    %217 = vmatpush1.msra.mxu0 %v74
    %218 = vmatprep.subr.mxu0 0.0
    %219 = vmatpush1.msra.mxu0 %v75
    %220 = vmatprep.subr.mxu0 0.0
    %221 = vmatpush1.msra.mxu0 %v76
    %222 = vmatprep.subr.mxu0 0.0
    %223 = vmatpush1.msra.mxu0 %v77
    %224 = vmatprep.subr.mxu0 0.0
    %225 = vmatpush1.msra.mxu0 %v78
    %226 = vmatprep.subr.mxu0 0.0
    %227 = vmatpush1.msra.mxu0 %v79
    %228 = vmatprep.subr.mxu0 0.0
    %229 = vmatpush1.msra.mxu0 %v80
    %230 = vmatprep.subr.mxu0 0.0
    %231 = vmatpush1.msra.mxu0 %v81
    %232 = vmatprep.subr.mxu0 0.0
    %233 = vmatpush1.msra.mxu0 %v82
    %234 = vmatprep.mubr.f32.mxu0 %v169
    %235 = vmatmul.mubr.f32.gmra.mrb[0].mxu0 %v168
    %v236 = vpop.f32.mrb[0].mxu0
    %v237 = vadd.f32 0.0, %v236
    %v238 = vpop.f32.mrb[0].mxu0
    %239 = vdwg.mxu0
    %v240 = vld [vmem:[#allocation3 + $0x40] sm:$0xff]
    %v241 = vld [vmem:[#allocation3 + $0x48] sm:$0xff]
    %v242 = vld [vmem:[#allocation3 + $0x50] sm:$0xff]
    %v243 = vld [vmem:[#allocation3 + $0x58] sm:$0xff]
    %v244 = vld [vmem:[#allocation3 + $0x60] sm:$0xff]
    %v245 = vld [vmem:[#allocation3 + $0x68] sm:$0xff]
    %v246 = vld [vmem:[#allocation3 + $0x70] sm:$0xff]
    %v247 = vld [vmem:[#allocation3 + $0x78] sm:$0xff]
    %vm248 = vcmask 261120
    %v250 = vsel %vm248, %v237, 0
    %252 = vmatprep.subr.mxu0 %v241
    %253 = vmatpush1.msra.mxu0 %v240
    %254 = vmatprep.subr.mxu0 %v243
    %255 = vmatpush1.msra.mxu0 %v242
    %256 = vmatprep.subr.mxu0 %v245
    %257 = vmatpush1.msra.mxu0 %v244
    %258 = vmatprep.subr.mxu0 %v247
    %259 = vmatpush1.msra.mxu0 %v246
    %260 = vmatprep.subr.mxu0 0.0
    %261 = vmatpush1.msra.mxu0 0.0
    %262 = vmatprep.subr.mxu0 0.0
    %263 = vmatpush1.msra.mxu0 0.0
    %264 = vmatprep.subr.mxu0 0.0
    %265 = vmatpush1.msra.mxu0 0.0
    %266 = vmatprep.subr.mxu0 0.0
    %267 = vmatpush1.msra.mxu0 0.0
    %268 = vmatprep.subr.mxu0 0.0
    %269 = vmatpush1.msra.mxu0 0.0
    %270 = vmatprep.subr.mxu0 0.0
    %271 = vmatpush1.msra.mxu0 0.0
    %272 = vmatprep.subr.mxu0 0.0
    %273 = vmatpush1.msra.mxu0 0.0
    %274 = vmatprep.subr.mxu0 0.0
    %275 = vmatpush1.msra.mxu0 0.0
    %276 = vmatprep.subr.mxu0 0.0
    %277 = vmatpush1.msra.mxu0 0.0
    %278 = vmatprep.subr.mxu0 0.0
    %279 = vmatpush1.msra.mxu0 0.0
    %280 = vmatprep.subr.mxu0 0.0
    %281 = vmatpush1.msra.mxu0 0.0
    %282 = vmatprep.subr.mxu0 0.0
    %283 = vmatpush1.msra.mxu0 0.0
    %284 = vmatprep.subr.mxu0 0.0
    %285 = vmatpush1.msra.mxu0 0.0
    %286 = vmatprep.subr.mxu0 0.0
    %287 = vmatpush1.msra.mxu0 0.0
    %288 = vmatprep.subr.mxu0 0.0
    %289 = vmatpush1.msra.mxu0 0.0
    %290 = vmatprep.subr.mxu0 0.0
    %291 = vmatpush1.msra.mxu0 0.0
    %292 = vmatprep.subr.mxu0 0.0
    %293 = vmatpush1.msra.mxu0 0.0
    %294 = vmatprep.subr.mxu0 0.0
    %295 = vmatpush1.msra.mxu0 0.0
    %296 = vmatprep.subr.mxu0 0.0
    %297 = vmatpush1.msra.mxu0 0.0
    %298 = vmatprep.subr.mxu0 0.0
    %299 = vmatpush1.msra.mxu0 0.0
    %300 = vmatprep.subr.mxu0 0.0
    %301 = vmatpush1.msra.mxu0 0.0
    %302 = vmatprep.subr.mxu0 0.0
    %303 = vmatpush1.msra.mxu0 0.0
    %304 = vmatprep.subr.mxu0 0.0
    %305 = vmatpush1.msra.mxu0 0.0
    %306 = vmatprep.subr.mxu0 0.0
    %307 = vmatpush1.msra.mxu0 0.0
    %308 = vmatprep.subr.mxu0 0.0
    %309 = vmatpush1.msra.mxu0 0.0
    %310 = vmatprep.subr.mxu0 0.0
    %311 = vmatpush1.msra.mxu0 0.0
    %312 = vmatprep.subr.mxu0 0.0
    %313 = vmatpush1.msra.mxu0 0.0
    %314 = vmatprep.subr.mxu0 0.0
    %315 = vmatpush1.msra.mxu0 0.0
    %316 = vmatprep.mubr.f32.mxu0 0.0
    %317 = vmatmul.mubr.f32.gmra.mrb[0].mxu0 %v250
    %v318 = vpop.f32.mrb[0].mxu0
    %v319 = vadd.f32 0.0, %v318
    %v320 = vpop.f32.mrb[0].mxu0
    %v321 = vadd.f32 0.0, %v320
    %322 = vdwg.mxu0
    %v324 = vsel %vm248, %v150, 0
    %326 = vmatprep.subr.mxu0 %v154
    %327 = vmatpush1.msra.mxu0 %v153
    %328 = vmatprep.subr.mxu0 %v156
    %329 = vmatpush1.msra.mxu0 %v155
    %330 = vmatprep.subr.mxu0 %v158
    %331 = vmatpush1.msra.mxu0 %v157
    %332 = vmatprep.subr.mxu0 %v160
    %333 = vmatpush1.msra.mxu0 %v159
    %334 = vmatprep.subr.mxu0 0.0
    %335 = vmatpush1.msra.mxu0 0.0
    %336 = vmatprep.subr.mxu0 0.0
    %337 = vmatpush1.msra.mxu0 0.0
    %338 = vmatprep.subr.mxu0 0.0
    %339 = vmatpush1.msra.mxu0 0.0
    %340 = vmatprep.subr.mxu0 0.0
    %341 = vmatpush1.msra.mxu0 0.0
    %342 = vmatprep.subr.mxu0 0.0
    %343 = vmatpush1.msra.mxu0 0.0
    %344 = vmatprep.subr.mxu0 0.0
    %345 = vmatpush1.msra.mxu0 0.0
    %346 = vmatprep.subr.mxu0 0.0
    %347 = vmatpush1.msra.mxu0 0.0
    %348 = vmatprep.subr.mxu0 0.0
    %349 = vmatpush1.msra.mxu0 0.0
    %350 = vmatprep.subr.mxu0 0.0
    %351 = vmatpush1.msra.mxu0 0.0
    %352 = vmatprep.subr.mxu0 0.0
    %353 = vmatpush1.msra.mxu0 0.0
    %354 = vmatprep.subr.mxu0 0.0
    %355 = vmatpush1.msra.mxu0 0.0
    %356 = vmatprep.subr.mxu0 0.0
    %357 = vmatpush1.msra.mxu0 0.0
    %358 = vmatprep.subr.mxu0 0.0
    %359 = vmatpush1.msra.mxu0 0.0
    %360 = vmatprep.subr.mxu0 0.0
    %361 = vmatpush1.msra.mxu0 0.0
    %362 = vmatprep.subr.mxu0 0.0
    %363 = vmatpush1.msra.mxu0 0.0
    %364 = vmatprep.subr.mxu0 0.0
    %365 = vmatpush1.msra.mxu0 0.0
    %366 = vmatprep.subr.mxu0 0.0
    %367 = vmatpush1.msra.mxu0 0.0
    %368 = vmatprep.subr.mxu0 0.0
    %369 = vmatpush1.msra.mxu0 0.0
    %370 = vmatprep.subr.mxu0 0.0
    %371 = vmatpush1.msra.mxu0 0.0
    %372 = vmatprep.subr.mxu0 0.0
    %373 = vmatpush1.msra.mxu0 0.0
    %374 = vmatprep.subr.mxu0 0.0
    %375 = vmatpush1.msra.mxu0 0.0
    %376 = vmatprep.subr.mxu0 0.0
    %377 = vmatpush1.msra.mxu0 0.0
    %378 = vmatprep.subr.mxu0 0.0
    %379 = vmatpush1.msra.mxu0 0.0
    %380 = vmatprep.subr.mxu0 0.0
    %381 = vmatpush1.msra.mxu0 0.0
    %382 = vmatprep.subr.mxu0 0.0
    %383 = vmatpush1.msra.mxu0 0.0
    %384 = vmatprep.subr.mxu0 0.0
    %385 = vmatpush1.msra.mxu0 0.0
    %386 = vmatprep.subr.mxu0 0.0
    %387 = vmatpush1.msra.mxu0 0.0
    %388 = vmatprep.subr.mxu0 0.0
    %389 = vmatpush1.msra.mxu0 0.0
    %390 = vmatprep.mubr.f32.mxu0 0.0
    %391 = vmatmul.mubr.f32.gmra.mrb[0].mxu0 %v324
    %v392 = vpop.f32.mrb[0].mxu0
    %v393 = vadd.f32 %v319, %v392
    %v394 = vpop.f32.mrb[0].mxu0
    %v395 = vadd.f32 %v321, %v394
    %396 = vdwg.mxu0
    %397 = vset.pattern.permute.xlu0 2
    %398 = vperm.xlu0 %397, %v41
    %v399 = vpop.permute.xlu0 %398
    %vm400 = vcmp.eq.s32.totalorder %v39, %v399
    %vm401 = vcmp.eq.s32.totalorder %v40, %v399
    %v402 = vsel %vm400, 1, 0
    %v403 = vsel %vm401, 1, 0
    %v404 = vcvt.s32.f32 %v402
    %v405 = vcvt.s32.f32 %v403
    %406 = vmatprep.subr.mxu0 0.0
    %407 = vmatpush1.msra.mxu0 %v51
    %408 = vmatprep.subr.mxu0 0.0
    %409 = vmatpush1.msra.mxu0 %v52
    %410 = vmatprep.subr.mxu0 0.0
    %411 = vmatpush1.msra.mxu0 %v53
    %412 = vmatprep.subr.mxu0 0.0
    %413 = vmatpush1.msra.mxu0 %v54
    %414 = vmatprep.subr.mxu0 0.0
    %415 = vmatpush1.msra.mxu0 %v55
    %416 = vmatprep.subr.mxu0 0.0
    %417 = vmatpush1.msra.mxu0 %v56
    %418 = vmatprep.subr.mxu0 0.0
    %419 = vmatpush1.msra.mxu0 %v57
    %420 = vmatprep.subr.mxu0 0.0
    %421 = vmatpush1.msra.mxu0 %v58
    %422 = vmatprep.subr.mxu0 0.0
    %423 = vmatpush1.msra.mxu0 %v59
    %424 = vmatprep.subr.mxu0 0.0
    %425 = vmatpush1.msra.mxu0 %v60
    %426 = vmatprep.subr.mxu0 0.0
    %427 = vmatpush1.msra.mxu0 %v61
    %428 = vmatprep.subr.mxu0 0.0
    %429 = vmatpush1.msra.mxu0 %v62
    %430 = vmatprep.subr.mxu0 0.0
    %431 = vmatpush1.msra.mxu0 %v63
    %432 = vmatprep.subr.mxu0 0.0
    %433 = vmatpush1.msra.mxu0 %v64
    %434 = vmatprep.subr.mxu0 0.0
    %435 = vmatpush1.msra.mxu0 %v65
    %436 = vmatprep.subr.mxu0 0.0
    %437 = vmatpush1.msra.mxu0 %v66
    %438 = vmatprep.subr.mxu0 0.0
    %439 = vmatpush1.msra.mxu0 %v67
    %440 = vmatprep.subr.mxu0 0.0
    %441 = vmatpush1.msra.mxu0 %v68
    %442 = vmatprep.subr.mxu0 0.0
    %443 = vmatpush1.msra.mxu0 %v69
    %444 = vmatprep.subr.mxu0 0.0
    %445 = vmatpush1.msra.mxu0 %v70
    %446 = vmatprep.subr.mxu0 0.0
    %447 = vmatpush1.msra.mxu0 %v71
    %448 = vmatprep.subr.mxu0 0.0
    %449 = vmatpush1.msra.mxu0 %v72
    %450 = vmatprep.subr.mxu0 0.0
    %451 = vmatpush1.msra.mxu0 %v73
    %452 = vmatprep.subr.mxu0 0.0
    %453 = vmatpush1.msra.mxu0 %v74
    %454 = vmatprep.subr.mxu0 0.0
    %455 = vmatpush1.msra.mxu0 %v75
    %456 = vmatprep.subr.mxu0 0.0
    %457 = vmatpush1.msra.mxu0 %v76
    %458 = vmatprep.subr.mxu0 0.0
    %459 = vmatpush1.msra.mxu0 %v77
    %460 = vmatprep.subr.mxu0 0.0
    %461 = vmatpush1.msra.mxu0 %v78
    %462 = vmatprep.subr.mxu0 0.0
    %463 = vmatpush1.msra.mxu0 %v79
    %464 = vmatprep.subr.mxu0 0.0
    %465 = vmatpush1.msra.mxu0 %v80
    %466 = vmatprep.subr.mxu0 0.0
    %467 = vmatpush1.msra.mxu0 %v81
    %468 = vmatprep.subr.mxu0 0.0
    %469 = vmatpush1.msra.mxu0 %v82
    %470 = vmatprep.mubr.f32.mxu0 %v405
    %471 = vmatmul.mubr.f32.gmra.mrb[0].mxu0 %v404
    %v472 = vpop.f32.mrb[0].mxu0
    %v473 = vadd.f32 0.0, %v472
    %v474 = vpop.f32.mrb[0].mxu0
    %475 = vdwg.mxu0
    %v476 = vld [vmem:[#allocation3 + $0x80] sm:$0xff]
    %v477 = vld [vmem:[#allocation3 + $0x88] sm:$0xff]
    %v478 = vld [vmem:[#allocation3 + $0x90] sm:$0xff]
    %v479 = vld [vmem:[#allocation3 + $0x98] sm:$0xff]
    %v480 = vld [vmem:[#allocation3 + $0xa0] sm:$0xff]
    %v481 = vld [vmem:[#allocation3 + $0xa8] sm:$0xff]
    %v482 = vld [vmem:[#allocation3 + $0xb0] sm:$0xff]
    %v483 = vld [vmem:[#allocation3 + $0xb8] sm:$0xff]
    %v485 = vsel %vm248, %v473, 0
    %487 = vmatprep.subr.mxu0 %v477
    %488 = vmatpush1.msra.mxu0 %v476
    %489 = vmatprep.subr.mxu0 %v479
    %490 = vmatpush1.msra.mxu0 %v478
    %491 = vmatprep.subr.mxu0 %v481
    %492 = vmatpush1.msra.mxu0 %v480
    %493 = vmatprep.subr.mxu0 %v483
    %494 = vmatpush1.msra.mxu0 %v482
    %495 = vmatprep.subr.mxu0 0.0
    %496 = vmatpush1.msra.mxu0 0.0
    %497 = vmatprep.subr.mxu0 0.0
    %498 = vmatpush1.msra.mxu0 0.0
    %499 = vmatprep.subr.mxu0 0.0
    %500 = vmatpush1.msra.mxu0 0.0
    %501 = vmatprep.subr.mxu0 0.0
    %502 = vmatpush1.msra.mxu0 0.0
    %503 = vmatprep.subr.mxu0 0.0
    %504 = vmatpush1.msra.mxu0 0.0
    %505 = vmatprep.subr.mxu0 0.0
    %506 = vmatpush1.msra.mxu0 0.0
    %507 = vmatprep.subr.mxu0 0.0
    %508 = vmatpush1.msra.mxu0 0.0
    %509 = vmatprep.subr.mxu0 0.0
    %510 = vmatpush1.msra.mxu0 0.0
    %511 = vmatprep.subr.mxu0 0.0
    %512 = vmatpush1.msra.mxu0 0.0
    %513 = vmatprep.subr.mxu0 0.0
    %514 = vmatpush1.msra.mxu0 0.0
    %515 = vmatprep.subr.mxu0 0.0
    %516 = vmatpush1.msra.mxu0 0.0
    %517 = vmatprep.subr.mxu0 0.0
    %518 = vmatpush1.msra.mxu0 0.0
    %519 = vmatprep.subr.mxu0 0.0
    %520 = vmatpush1.msra.mxu0 0.0
    %521 = vmatprep.subr.mxu0 0.0
    %522 = vmatpush1.msra.mxu0 0.0
    %523 = vmatprep.subr.mxu0 0.0
    %524 = vmatpush1.msra.mxu0 0.0
    %525 = vmatprep.subr.mxu0 0.0
    %526 = vmatpush1.msra.mxu0 0.0
    %527 = vmatprep.subr.mxu0 0.0
    %528 = vmatpush1.msra.mxu0 0.0
    %529 = vmatprep.subr.mxu0 0.0
    %530 = vmatpush1.msra.mxu0 0.0
    %531 = vmatprep.subr.mxu0 0.0
    %532 = vmatpush1.msra.mxu0 0.0
    %533 = vmatprep.subr.mxu0 0.0
    %534 = vmatpush1.msra.mxu0 0.0
    %535 = vmatprep.subr.mxu0 0.0
    %536 = vmatpush1.msra.mxu0 0.0
    %537 = vmatprep.subr.mxu0 0.0
    %538 = vmatpush1.msra.mxu0 0.0
    %539 = vmatprep.subr.mxu0 0.0
    %540 = vmatpush1.msra.mxu0 0.0
    %541 = vmatprep.subr.mxu0 0.0
    %542 = vmatpush1.msra.mxu0 0.0
    %543 = vmatprep.subr.mxu0 0.0
    %544 = vmatpush1.msra.mxu0 0.0
    %545 = vmatprep.subr.mxu0 0.0
    %546 = vmatpush1.msra.mxu0 0.0
    %547 = vmatprep.subr.mxu0 0.0
    %548 = vmatpush1.msra.mxu0 0.0
    %549 = vmatprep.subr.mxu0 0.0
    %550 = vmatpush1.msra.mxu0 0.0
    %551 = vmatprep.mubr.f32.mxu0 0.0
    %552 = vmatmul.mubr.f32.gmra.mrb[0].mxu0 %v485
    %v553 = vpop.f32.mrb[0].mxu0
    %v554 = vadd.f32 0.0, %v553
    %v555 = vpop.f32.mrb[0].mxu0
    %v556 = vadd.f32 0.0, %v555
    %557 = vdwg.mxu0
    %v558 = vadd.f32 %v393, %v554
    %v559 = vadd.f32 %v395, %v556
    %560 = vset.pattern.permute.xlu0 3
    %561 = vperm.xlu0 %560, %v41
    %v562 = vpop.permute.xlu0 %561
    %vm563 = vcmp.eq.s32.totalorder %v39, %v562
    %vm564 = vcmp.eq.s32.totalorder %v40, %v562
    %v565 = vsel %vm563, 1, 0
    %v566 = vsel %vm564, 1, 0
    %v567 = vcvt.s32.f32 %v565
    %v568 = vcvt.s32.f32 %v566
    %569 = vmatprep.subr.mxu0 0.0
    %570 = vmatpush1.msra.mxu0 %v51
    %571 = vmatprep.subr.mxu0 0.0
    %572 = vmatpush1.msra.mxu0 %v52
    %573 = vmatprep.subr.mxu0 0.0
    %574 = vmatpush1.msra.mxu0 %v53
    %575 = vmatprep.subr.mxu0 0.0
    %576 = vmatpush1.msra.mxu0 %v54
    %577 = vmatprep.subr.mxu0 0.0
    %578 = vmatpush1.msra.mxu0 %v55
    %579 = vmatprep.subr.mxu0 0.0
    %580 = vmatpush1.msra.mxu0 %v56
    %581 = vmatprep.subr.mxu0 0.0
    %582 = vmatpush1.msra.mxu0 %v57
    %583 = vmatprep.subr.mxu0 0.0
    %584 = vmatpush1.msra.mxu0 %v58
    %585 = vmatprep.subr.mxu0 0.0
    %586 = vmatpush1.msra.mxu0 %v59
    %587 = vmatprep.subr.mxu0 0.0
    %588 = vmatpush1.msra.mxu0 %v60
    %589 = vmatprep.subr.mxu0 0.0
    %590 = vmatpush1.msra.mxu0 %v61
    %591 = vmatprep.subr.mxu0 0.0
    %592 = vmatpush1.msra.mxu0 %v62
    %593 = vmatprep.subr.mxu0 0.0
    %594 = vmatpush1.msra.mxu0 %v63
    %595 = vmatprep.subr.mxu0 0.0
    %596 = vmatpush1.msra.mxu0 %v64
    %597 = vmatprep.subr.mxu0 0.0
    %598 = vmatpush1.msra.mxu0 %v65
    %599 = vmatprep.subr.mxu0 0.0
    %600 = vmatpush1.msra.mxu0 %v66
    %601 = vmatprep.subr.mxu0 0.0
    %602 = vmatpush1.msra.mxu0 %v67
    %603 = vmatprep.subr.mxu0 0.0
    %604 = vmatpush1.msra.mxu0 %v68
    %605 = vmatprep.subr.mxu0 0.0
    %606 = vmatpush1.msra.mxu0 %v69
    %607 = vmatprep.subr.mxu0 0.0
    %608 = vmatpush1.msra.mxu0 %v70
    %609 = vmatprep.subr.mxu0 0.0
    %610 = vmatpush1.msra.mxu0 %v71
    %611 = vmatprep.subr.mxu0 0.0
    %612 = vmatpush1.msra.mxu0 %v72
    %613 = vmatprep.subr.mxu0 0.0
    %614 = vmatpush1.msra.mxu0 %v73
    %615 = vmatprep.subr.mxu0 0.0
    %616 = vmatpush1.msra.mxu0 %v74
    %617 = vmatprep.subr.mxu0 0.0
    %618 = vmatpush1.msra.mxu0 %v75
    %619 = vmatprep.subr.mxu0 0.0
    %620 = vmatpush1.msra.mxu0 %v76
    %621 = vmatprep.subr.mxu0 0.0
    %622 = vmatpush1.msra.mxu0 %v77
    %623 = vmatprep.subr.mxu0 0.0
    %624 = vmatpush1.msra.mxu0 %v78
    %625 = vmatprep.subr.mxu0 0.0
    %626 = vmatpush1.msra.mxu0 %v79
    %627 = vmatprep.subr.mxu0 0.0
    %628 = vmatpush1.msra.mxu0 %v80
    %629 = vmatprep.subr.mxu0 0.0
    %630 = vmatpush1.msra.mxu0 %v81
    %631 = vmatprep.subr.mxu0 0.0
    %632 = vmatpush1.msra.mxu0 %v82
    %633 = vmatprep.mubr.f32.mxu0 %v568
    %634 = vmatmul.mubr.f32.gmra.mrb[0].mxu0 %v567
    %v635 = vpop.f32.mrb[0].mxu0
    %v636 = vadd.f32 0.0, %v635
    %v637 = vpop.f32.mrb[0].mxu0
    %638 = vdwg.mxu0
    %v639 = vld [vmem:[#allocation3 + $0xc0] sm:$0xff]
    %v640 = vld [vmem:[#allocation3 + $0xc8] sm:$0xff]
    %v641 = vld [vmem:[#allocation3 + $0xd0] sm:$0xff]
    %v642 = vld [vmem:[#allocation3 + $0xd8] sm:$0xff]
    %v643 = vld [vmem:[#allocation3 + $0xe0] sm:$0xff]
    %v644 = vld [vmem:[#allocation3 + $0xe8] sm:$0xff]
    %v645 = vld [vmem:[#allocation3 + $0xf0] sm:$0xff]
    %v646 = vld [vmem:[#allocation3 + $0xf8] sm:$0xff]
    %v648 = vsel %vm248, %v636, 0
    %650 = vmatprep.subr.mxu0 %v640
    %651 = vmatpush1.msra.mxu0 %v639
    %652 = vmatprep.subr.mxu0 %v642
    %653 = vmatpush1.msra.mxu0 %v641
    %654 = vmatprep.subr.mxu0 %v644
    %655 = vmatpush1.msra.mxu0 %v643
    %656 = vmatprep.subr.mxu0 %v646
    %657 = vmatpush1.msra.mxu0 %v645
    %658 = vmatprep.subr.mxu0 0.0
    %659 = vmatpush1.msra.mxu0 0.0
    %660 = vmatprep.subr.mxu0 0.0
    %661 = vmatpush1.msra.mxu0 0.0
    %662 = vmatprep.subr.mxu0 0.0
    %663 = vmatpush1.msra.mxu0 0.0
    %664 = vmatprep.subr.mxu0 0.0
    %665 = vmatpush1.msra.mxu0 0.0
    %666 = vmatprep.subr.mxu0 0.0
    %667 = vmatpush1.msra.mxu0 0.0
    %668 = vmatprep.subr.mxu0 0.0
    %669 = vmatpush1.msra.mxu0 0.0
    %670 = vmatprep.subr.mxu0 0.0
    %671 = vmatpush1.msra.mxu0 0.0
    %672 = vmatprep.subr.mxu0 0.0
    %673 = vmatpush1.msra.mxu0 0.0
    %674 = vmatprep.subr.mxu0 0.0
    %675 = vmatpush1.msra.mxu0 0.0
    %676 = vmatprep.subr.mxu0 0.0
    %677 = vmatpush1.msra.mxu0 0.0
    %678 = vmatprep.subr.mxu0 0.0
    %679 = vmatpush1.msra.mxu0 0.0
    %680 = vmatprep.subr.mxu0 0.0
    %681 = vmatpush1.msra.mxu0 0.0
    %682 = vmatprep.subr.mxu0 0.0
    %683 = vmatpush1.msra.mxu0 0.0
    %684 = vmatprep.subr.mxu0 0.0
    %685 = vmatpush1.msra.mxu0 0.0
    %686 = vmatprep.subr.mxu0 0.0
    %687 = vmatpush1.msra.mxu0 0.0
    %688 = vmatprep.subr.mxu0 0.0
    %689 = vmatpush1.msra.mxu0 0.0
    %690 = vmatprep.subr.mxu0 0.0
    %691 = vmatpush1.msra.mxu0 0.0
    %692 = vmatprep.subr.mxu0 0.0
    %693 = vmatpush1.msra.mxu0 0.0
    %694 = vmatprep.subr.mxu0 0.0
    %695 = vmatpush1.msra.mxu0 0.0
    %696 = vmatprep.subr.mxu0 0.0
    %697 = vmatpush1.msra.mxu0 0.0
    %698 = vmatprep.subr.mxu0 0.0
    %699 = vmatpush1.msra.mxu0 0.0
    %700 = vmatprep.subr.mxu0 0.0
    %701 = vmatpush1.msra.mxu0 0.0
    %702 = vmatprep.subr.mxu0 0.0
    %703 = vmatpush1.msra.mxu0 0.0
    %704 = vmatprep.subr.mxu0 0.0
    %705 = vmatpush1.msra.mxu0 0.0
    %706 = vmatprep.subr.mxu0 0.0
    %707 = vmatpush1.msra.mxu0 0.0
    %708 = vmatprep.subr.mxu0 0.0
    %709 = vmatpush1.msra.mxu0 0.0
    %710 = vmatprep.subr.mxu0 0.0
    %711 = vmatpush1.msra.mxu0 0.0
    %712 = vmatprep.subr.mxu0 0.0
    %713 = vmatpush1.msra.mxu0 0.0
    %714 = vmatprep.mubr.f32.mxu0 0.0
    %715 = vmatmul.mubr.f32.gmra.mrb[0].mxu0 %v648
    %v716 = vpop.f32.mrb[0].mxu0
    %v717 = vadd.f32 0.0, %v716
    %v718 = vpop.f32.mrb[0].mxu0
    %v719 = vadd.f32 0.0, %v718
    %720 = vdwg.mxu0
    %v721 = vadd.f32 %v558, %v717
    %v722 = vadd.f32 %v559, %v719
    %723 = vset.pattern.permute.xlu0 4
    %724 = vperm.xlu0 %723, %v41
    %v725 = vpop.permute.xlu0 %724
    %vm726 = vcmp.eq.s32.totalorder %v39, %v725
    %vm727 = vcmp.eq.s32.totalorder %v40, %v725
    %v728 = vsel %vm726, 1, 0
    %v729 = vsel %vm727, 1, 0
    %v730 = vcvt.s32.f32 %v728
    %v731 = vcvt.s32.f32 %v729
    %732 = vmatprep.subr.mxu0 0.0
    %733 = vmatpush1.msra.mxu0 %v51
    %734 = vmatprep.subr.mxu0 0.0
    %735 = vmatpush1.msra.mxu0 %v52
    %736 = vmatprep.subr.mxu0 0.0
    %737 = vmatpush1.msra.mxu0 %v53
    %738 = vmatprep.subr.mxu0 0.0
    %739 = vmatpush1.msra.mxu0 %v54
    %740 = vmatprep.subr.mxu0 0.0
    %741 = vmatpush1.msra.mxu0 %v55
    %742 = vmatprep.subr.mxu0 0.0
    %743 = vmatpush1.msra.mxu0 %v56
    %744 = vmatprep.subr.mxu0 0.0
    %745 = vmatpush1.msra.mxu0 %v57
    %746 = vmatprep.subr.mxu0 0.0
    %747 = vmatpush1.msra.mxu0 %v58
    %748 = vmatprep.subr.mxu0 0.0
    %749 = vmatpush1.msra.mxu0 %v59
    %750 = vmatprep.subr.mxu0 0.0
    %751 = vmatpush1.msra.mxu0 %v60
    %752 = vmatprep.subr.mxu0 0.0
    %753 = vmatpush1.msra.mxu0 %v61
    %754 = vmatprep.subr.mxu0 0.0
    %755 = vmatpush1.msra.mxu0 %v62
    %756 = vmatprep.subr.mxu0 0.0
    %757 = vmatpush1.msra.mxu0 %v63
    %758 = vmatprep.subr.mxu0 0.0
    %759 = vmatpush1.msra.mxu0 %v64
    %760 = vmatprep.subr.mxu0 0.0
    %761 = vmatpush1.msra.mxu0 %v65
    %762 = vmatprep.subr.mxu0 0.0
    %763 = vmatpush1.msra.mxu0 %v66
    %764 = vmatprep.subr.mxu0 0.0
    %765 = vmatpush1.msra.mxu0 %v67
    %766 = vmatprep.subr.mxu0 0.0
    %767 = vmatpush1.msra.mxu0 %v68
    %768 = vmatprep.subr.mxu0 0.0
    %769 = vmatpush1.msra.mxu0 %v69
    %770 = vmatprep.subr.mxu0 0.0
    %771 = vmatpush1.msra.mxu0 %v70
    %772 = vmatprep.subr.mxu0 0.0
    %773 = vmatpush1.msra.mxu0 %v71
    %774 = vmatprep.subr.mxu0 0.0
    %775 = vmatpush1.msra.mxu0 %v72
    %776 = vmatprep.subr.mxu0 0.0
    %777 = vmatpush1.msra.mxu0 %v73
    %778 = vmatprep.subr.mxu0 0.0
    %779 = vmatpush1.msra.mxu0 %v74
    %780 = vmatprep.subr.mxu0 0.0
    %781 = vmatpush1.msra.mxu0 %v75
    %782 = vmatprep.subr.mxu0 0.0
    %783 = vmatpush1.msra.mxu0 %v76
    %784 = vmatprep.subr.mxu0 0.0
    %785 = vmatpush1.msra.mxu0 %v77
    %786 = vmatprep.subr.mxu0 0.0
    %787 = vmatpush1.msra.mxu0 %v78
    %788 = vmatprep.subr.mxu0 0.0
    %789 = vmatpush1.msra.mxu0 %v79
    %790 = vmatprep.subr.mxu0 0.0
    %791 = vmatpush1.msra.mxu0 %v80
    %792 = vmatprep.subr.mxu0 0.0
    %793 = vmatpush1.msra.mxu0 %v81
    %794 = vmatprep.subr.mxu0 0.0
    %795 = vmatpush1.msra.mxu0 %v82
    %796 = vmatprep.mubr.f32.mxu0 %v731
    %797 = vmatmul.mubr.f32.gmra.mrb[0].mxu0 %v730
    %v798 = vpop.f32.mrb[0].mxu0
    %v799 = vadd.f32 0.0, %v798
    %v800 = vpop.f32.mrb[0].mxu0
    %801 = vdwg.mxu0
    %v802 = vld [vmem:[#allocation3 + $0x100] sm:$0xff]
    %v803 = vld [vmem:[#allocation3 + $0x108] sm:$0xff]
    %v804 = vld [vmem:[#allocation3 + $0x110] sm:$0xff]
    %v805 = vld [vmem:[#allocation3 + $0x118] sm:$0xff]
    %v806 = vld [vmem:[#allocation3 + $0x120] sm:$0xff]
    %v807 = vld [vmem:[#allocation3 + $0x128] sm:$0xff]
    %v808 = vld [vmem:[#allocation3 + $0x130] sm:$0xff]
    %v809 = vld [vmem:[#allocation3 + $0x138] sm:$0xff]
    %v811 = vsel %vm248, %v799, 0
    %813 = vmatprep.subr.mxu0 %v803
    %814 = vmatpush1.msra.mxu0 %v802
    %815 = vmatprep.subr.mxu0 %v805
    %816 = vmatpush1.msra.mxu0 %v804
    %817 = vmatprep.subr.mxu0 %v807
    %818 = vmatpush1.msra.mxu0 %v806
    %819 = vmatprep.subr.mxu0 %v809
    %820 = vmatpush1.msra.mxu0 %v808
    %821 = vmatprep.subr.mxu0 0.0
    %822 = vmatpush1.msra.mxu0 0.0
    %823 = vmatprep.subr.mxu0 0.0
    %824 = vmatpush1.msra.mxu0 0.0
    %825 = vmatprep.subr.mxu0 0.0
    %826 = vmatpush1.msra.mxu0 0.0
    %827 = vmatprep.subr.mxu0 0.0
    %828 = vmatpush1.msra.mxu0 0.0
    %829 = vmatprep.subr.mxu0 0.0
    %830 = vmatpush1.msra.mxu0 0.0
    %831 = vmatprep.subr.mxu0 0.0
    %832 = vmatpush1.msra.mxu0 0.0
    %833 = vmatprep.subr.mxu0 0.0
    %834 = vmatpush1.msra.mxu0 0.0
    %835 = vmatprep.subr.mxu0 0.0
    %836 = vmatpush1.msra.mxu0 0.0
    %837 = vmatprep.subr.mxu0 0.0
    %838 = vmatpush1.msra.mxu0 0.0
    %839 = vmatprep.subr.mxu0 0.0
    %840 = vmatpush1.msra.mxu0 0.0
    %841 = vmatprep.subr.mxu0 0.0
    %842 = vmatpush1.msra.mxu0 0.0
    %843 = vmatprep.subr.mxu0 0.0
    %844 = vmatpush1.msra.mxu0 0.0
    %845 = vmatprep.subr.mxu0 0.0
    %846 = vmatpush1.msra.mxu0 0.0
    %847 = vmatprep.subr.mxu0 0.0
    %848 = vmatpush1.msra.mxu0 0.0
    %849 = vmatprep.subr.mxu0 0.0
    %850 = vmatpush1.msra.mxu0 0.0
    %851 = vmatprep.subr.mxu0 0.0
    %852 = vmatpush1.msra.mxu0 0.0
    %853 = vmatprep.subr.mxu0 0.0
    %854 = vmatpush1.msra.mxu0 0.0
    %855 = vmatprep.subr.mxu0 0.0
    %856 = vmatpush1.msra.mxu0 0.0
    %857 = vmatprep.subr.mxu0 0.0
    %858 = vmatpush1.msra.mxu0 0.0
    %859 = vmatprep.subr.mxu0 0.0
    %860 = vmatpush1.msra.mxu0 0.0
    %861 = vmatprep.subr.mxu0 0.0
    %862 = vmatpush1.msra.mxu0 0.0
    %863 = vmatprep.subr.mxu0 0.0
    %864 = vmatpush1.msra.mxu0 0.0
    %865 = vmatprep.subr.mxu0 0.0
    %866 = vmatpush1.msra.mxu0 0.0
    %867 = vmatprep.subr.mxu0 0.0
    %868 = vmatpush1.msra.mxu0 0.0
    %869 = vmatprep.subr.mxu0 0.0
    %870 = vmatpush1.msra.mxu0 0.0
    %871 = vmatprep.subr.mxu0 0.0
    %872 = vmatpush1.msra.mxu0 0.0
    %873 = vmatprep.subr.mxu0 0.0
    %874 = vmatpush1.msra.mxu0 0.0
    %875 = vmatprep.subr.mxu0 0.0
    %876 = vmatpush1.msra.mxu0 0.0
    %877 = vmatprep.mubr.f32.mxu0 0.0
    %878 = vmatmul.mubr.f32.gmra.mrb[0].mxu0 %v811
    %v879 = vpop.f32.mrb[0].mxu0
    %v880 = vadd.f32 0.0, %v879
    %v881 = vpop.f32.mrb[0].mxu0
    %v882 = vadd.f32 0.0, %v881
    %883 = vdwg.mxu0
    %v884 = vadd.f32 %v721, %v880
    %v885 = vadd.f32 %v722, %v882
    %886 = vset.pattern.permute.xlu0 5
    %887 = vperm.xlu0 %886, %v41
    %v888 = vpop.permute.xlu0 %887
    %vm889 = vcmp.eq.s32.totalorder %v39, %v888
    %vm890 = vcmp.eq.s32.totalorder %v40, %v888
    %v891 = vsel %vm889, 1, 0
    %v892 = vsel %vm890, 1, 0
    %v893 = vcvt.s32.f32 %v891
    %v894 = vcvt.s32.f32 %v892
    %895 = vmatprep.subr.mxu0 0.0
    %896 = vmatpush1.msra.mxu0 %v51
    %897 = vmatprep.subr.mxu0 0.0
    %898 = vmatpush1.msra.mxu0 %v52
    %899 = vmatprep.subr.mxu0 0.0
    %900 = vmatpush1.msra.mxu0 %v53
    %901 = vmatprep.subr.mxu0 0.0
    %902 = vmatpush1.msra.mxu0 %v54
    %903 = vmatprep.subr.mxu0 0.0
    %904 = vmatpush1.msra.mxu0 %v55
    %905 = vmatprep.subr.mxu0 0.0
    %906 = vmatpush1.msra.mxu0 %v56
    %907 = vmatprep.subr.mxu0 0.0
    %908 = vmatpush1.msra.mxu0 %v57
    %909 = vmatprep.subr.mxu0 0.0
    %910 = vmatpush1.msra.mxu0 %v58
    %911 = vmatprep.subr.mxu0 0.0
    %912 = vmatpush1.msra.mxu0 %v59
    %913 = vmatprep.subr.mxu0 0.0
    %914 = vmatpush1.msra.mxu0 %v60
    %915 = vmatprep.subr.mxu0 0.0
    %916 = vmatpush1.msra.mxu0 %v61
    %917 = vmatprep.subr.mxu0 0.0
    %918 = vmatpush1.msra.mxu0 %v62
    %919 = vmatprep.subr.mxu0 0.0
    %920 = vmatpush1.msra.mxu0 %v63
    %921 = vmatprep.subr.mxu0 0.0
    %922 = vmatpush1.msra.mxu0 %v64
    %923 = vmatprep.subr.mxu0 0.0
    %924 = vmatpush1.msra.mxu0 %v65
    %925 = vmatprep.subr.mxu0 0.0
    %926 = vmatpush1.msra.mxu0 %v66
    %927 = vmatprep.subr.mxu0 0.0
    %928 = vmatpush1.msra.mxu0 %v67
    %929 = vmatprep.subr.mxu0 0.0
    %930 = vmatpush1.msra.mxu0 %v68
    %931 = vmatprep.subr.mxu0 0.0
    %932 = vmatpush1.msra.mxu0 %v69
    %933 = vmatprep.subr.mxu0 0.0
    %934 = vmatpush1.msra.mxu0 %v70
    %935 = vmatprep.subr.mxu0 0.0
    %936 = vmatpush1.msra.mxu0 %v71
    %937 = vmatprep.subr.mxu0 0.0
    %938 = vmatpush1.msra.mxu0 %v72
    %939 = vmatprep.subr.mxu0 0.0
    %940 = vmatpush1.msra.mxu0 %v73
    %941 = vmatprep.subr.mxu0 0.0
    %942 = vmatpush1.msra.mxu0 %v74
    %943 = vmatprep.subr.mxu0 0.0
    %944 = vmatpush1.msra.mxu0 %v75
    %945 = vmatprep.subr.mxu0 0.0
    %946 = vmatpush1.msra.mxu0 %v76
    %947 = vmatprep.subr.mxu0 0.0
    %948 = vmatpush1.msra.mxu0 %v77
    %949 = vmatprep.subr.mxu0 0.0
    %950 = vmatpush1.msra.mxu0 %v78
    %951 = vmatprep.subr.mxu0 0.0
    %952 = vmatpush1.msra.mxu0 %v79
    %953 = vmatprep.subr.mxu0 0.0
    %954 = vmatpush1.msra.mxu0 %v80
    %955 = vmatprep.subr.mxu0 0.0
    %956 = vmatpush1.msra.mxu0 %v81
    %957 = vmatprep.subr.mxu0 0.0
    %958 = vmatpush1.msra.mxu0 %v82
    %959 = vmatprep.mubr.f32.mxu0 %v894
    %960 = vmatmul.mubr.f32.gmra.mrb[0].mxu0 %v893
    %v961 = vpop.f32.mrb[0].mxu0
    %v962 = vadd.f32 0.0, %v961
    %v963 = vpop.f32.mrb[0].mxu0
    %964 = vdwg.mxu0
    %v965 = vld [vmem:[#allocation3 + $0x140] sm:$0xff]
    %v966 = vld [vmem:[#allocation3 + $0x148] sm:$0xff]
    %v967 = vld [vmem:[#allocation3 + $0x150] sm:$0xff]
    %v968 = vld [vmem:[#allocation3 + $0x158] sm:$0xff]
    %v969 = vld [vmem:[#allocation3 + $0x160] sm:$0xff]
    %v970 = vld [vmem:[#allocation3 + $0x168] sm:$0xff]
    %v971 = vld [vmem:[#allocation3 + $0x170] sm:$0xff]
    %v972 = vld [vmem:[#allocation3 + $0x178] sm:$0xff]
    %v974 = vsel %vm248, %v962, 0
    %976 = vmatprep.subr.mxu0 %v966
    %977 = vmatpush1.msra.mxu0 %v965
    %978 = vmatprep.subr.mxu0 %v968
    %979 = vmatpush1.msra.mxu0 %v967
    %980 = vmatprep.subr.mxu0 %v970
    %981 = vmatpush1.msra.mxu0 %v969
    %982 = vmatprep.subr.mxu0 %v972
    %983 = vmatpush1.msra.mxu0 %v971
    %984 = vmatprep.subr.mxu0 0.0
    %985 = vmatpush1.msra.mxu0 0.0
    %986 = vmatprep.subr.mxu0 0.0
    %987 = vmatpush1.msra.mxu0 0.0
    %988 = vmatprep.subr.mxu0 0.0
    %989 = vmatpush1.msra.mxu0 0.0
    %990 = vmatprep.subr.mxu0 0.0
    %991 = vmatpush1.msra.mxu0 0.0
    %992 = vmatprep.subr.mxu0 0.0
    %993 = vmatpush1.msra.mxu0 0.0
    %994 = vmatprep.subr.mxu0 0.0
    %995 = vmatpush1.msra.mxu0 0.0
    %996 = vmatprep.subr.mxu0 0.0
    %997 = vmatpush1.msra.mxu0 0.0
    %998 = vmatprep.subr.mxu0 0.0
    %999 = vmatpush1.msra.mxu0 0.0
    %1000 = vmatprep.subr.mxu0 0.0
    %1001 = vmatpush1.msra.mxu0 0.0
    %1002 = vmatprep.subr.mxu0 0.0
    %1003 = vmatpush1.msra.mxu0 0.0
    %1004 = vmatprep.subr.mxu0 0.0
    %1005 = vmatpush1.msra.mxu0 0.0
    %1006 = vmatprep.subr.mxu0 0.0
    %1007 = vmatpush1.msra.mxu0 0.0
    %1008 = vmatprep.subr.mxu0 0.0
    %1009 = vmatpush1.msra.mxu0 0.0
    %1010 = vmatprep.subr.mxu0 0.0
    %1011 = vmatpush1.msra.mxu0 0.0
    %1012 = vmatprep.subr.mxu0 0.0
    %1013 = vmatpush1.msra.mxu0 0.0
    %1014 = vmatprep.subr.mxu0 0.0
    %1015 = vmatpush1.msra.mxu0 0.0
    %1016 = vmatprep.subr.mxu0 0.0
    %1017 = vmatpush1.msra.mxu0 0.0
    %1018 = vmatprep.subr.mxu0 0.0
    %1019 = vmatpush1.msra.mxu0 0.0
    %1020 = vmatprep.subr.mxu0 0.0
    %1021 = vmatpush1.msra.mxu0 0.0
    %1022 = vmatprep.subr.mxu0 0.0
    %1023 = vmatpush1.msra.mxu0 0.0
    %1024 = vmatprep.subr.mxu0 0.0
    %1025 = vmatpush1.msra.mxu0 0.0
    %1026 = vmatprep.subr.mxu0 0.0
    %1027 = vmatpush1.msra.mxu0 0.0
    %1028 = vmatprep.subr.mxu0 0.0
    %1029 = vmatpush1.msra.mxu0 0.0
    %1030 = vmatprep.subr.mxu0 0.0
    %1031 = vmatpush1.msra.mxu0 0.0
    %1032 = vmatprep.subr.mxu0 0.0
    %1033 = vmatpush1.msra.mxu0 0.0
    %1034 = vmatprep.subr.mxu0 0.0
    %1035 = vmatpush1.msra.mxu0 0.0
    %1036 = vmatprep.subr.mxu0 0.0
    %1037 = vmatpush1.msra.mxu0 0.0
    %1038 = vmatprep.subr.mxu0 0.0
    %1039 = vmatpush1.msra.mxu0 0.0
    %1040 = vmatprep.mubr.f32.mxu0 0.0
    %1041 = vmatmul.mubr.f32.gmra.mrb[0].mxu0 %v974
    %v1042 = vpop.f32.mrb[0].mxu0
    %v1043 = vadd.f32 0.0, %v1042
    %v1044 = vpop.f32.mrb[0].mxu0
    %v1045 = vadd.f32 0.0, %v1044
    %1046 = vdwg.mxu0
    %v1047 = vadd.f32 %v884, %v1043
    %v1048 = vadd.f32 %v885, %v1045
    %1049 = vset.pattern.permute.xlu0 6
    %1050 = vperm.xlu0 %1049, %v41
    %v1051 = vpop.permute.xlu0 %1050
    %vm1052 = vcmp.eq.s32.totalorder %v39, %v1051
    %vm1053 = vcmp.eq.s32.totalorder %v40, %v1051
    %v1054 = vsel %vm1052, 1, 0
    %v1055 = vsel %vm1053, 1, 0
    %v1056 = vcvt.s32.f32 %v1054
    %v1057 = vcvt.s32.f32 %v1055
    %1058 = vmatprep.subr.mxu0 0.0
    %1059 = vmatpush1.msra.mxu0 %v51
    %1060 = vmatprep.subr.mxu0 0.0
    %1061 = vmatpush1.msra.mxu0 %v52
    %1062 = vmatprep.subr.mxu0 0.0
    %1063 = vmatpush1.msra.mxu0 %v53
    %1064 = vmatprep.subr.mxu0 0.0
    %1065 = vmatpush1.msra.mxu0 %v54
    %1066 = vmatprep.subr.mxu0 0.0
    %1067 = vmatpush1.msra.mxu0 %v55
    %1068 = vmatprep.subr.mxu0 0.0
    %1069 = vmatpush1.msra.mxu0 %v56
    %1070 = vmatprep.subr.mxu0 0.0
    %1071 = vmatpush1.msra.mxu0 %v57
    %1072 = vmatprep.subr.mxu0 0.0
    %1073 = vmatpush1.msra.mxu0 %v58
    %1074 = vmatprep.subr.mxu0 0.0
    %1075 = vmatpush1.msra.mxu0 %v59
    %1076 = vmatprep.subr.mxu0 0.0
    %1077 = vmatpush1.msra.mxu0 %v60
    %1078 = vmatprep.subr.mxu0 0.0
    %1079 = vmatpush1.msra.mxu0 %v61
    %1080 = vmatprep.subr.mxu0 0.0
    %1081 = vmatpush1.msra.mxu0 %v62
    %1082 = vmatprep.subr.mxu0 0.0
    %1083 = vmatpush1.msra.mxu0 %v63
    %1084 = vmatprep.subr.mxu0 0.0
    %1085 = vmatpush1.msra.mxu0 %v64
    %1086 = vmatprep.subr.mxu0 0.0
    %1087 = vmatpush1.msra.mxu0 %v65
    %1088 = vmatprep.subr.mxu0 0.0
    %1089 = vmatpush1.msra.mxu0 %v66
    %1090 = vmatprep.subr.mxu0 0.0
    %1091 = vmatpush1.msra.mxu0 %v67
    %1092 = vmatprep.subr.mxu0 0.0
    %1093 = vmatpush1.msra.mxu0 %v68
    %1094 = vmatprep.subr.mxu0 0.0
    %1095 = vmatpush1.msra.mxu0 %v69
    %1096 = vmatprep.subr.mxu0 0.0
    %1097 = vmatpush1.msra.mxu0 %v70
    %1098 = vmatprep.subr.mxu0 0.0
    %1099 = vmatpush1.msra.mxu0 %v71
    %1100 = vmatprep.subr.mxu0 0.0
    %1101 = vmatpush1.msra.mxu0 %v72
    %1102 = vmatprep.subr.mxu0 0.0
    %1103 = vmatpush1.msra.mxu0 %v73
    %1104 = vmatprep.subr.mxu0 0.0
    %1105 = vmatpush1.msra.mxu0 %v74
    %1106 = vmatprep.subr.mxu0 0.0
    %1107 = vmatpush1.msra.mxu0 %v75
    %1108 = vmatprep.subr.mxu0 0.0
    %1109 = vmatpush1.msra.mxu0 %v76
    %1110 = vmatprep.subr.mxu0 0.0
    %1111 = vmatpush1.msra.mxu0 %v77
    %1112 = vmatprep.subr.mxu0 0.0
    %1113 = vmatpush1.msra.mxu0 %v78
    %1114 = vmatprep.subr.mxu0 0.0
    %1115 = vmatpush1.msra.mxu0 %v79
    %1116 = vmatprep.subr.mxu0 0.0
    %1117 = vmatpush1.msra.mxu0 %v80
    %1118 = vmatprep.subr.mxu0 0.0
    %1119 = vmatpush1.msra.mxu0 %v81
    %1120 = vmatprep.subr.mxu0 0.0
    %1121 = vmatpush1.msra.mxu0 %v82
    %1122 = vmatprep.mubr.f32.mxu0 %v1057
    %1123 = vmatmul.mubr.f32.gmra.mrb[0].mxu0 %v1056
    %v1124 = vpop.f32.mrb[0].mxu0
    %v1125 = vadd.f32 0.0, %v1124
    %v1126 = vpop.f32.mrb[0].mxu0
    %1127 = vdwg.mxu0
    %v1128 = vld [vmem:[#allocation3 + $0x180] sm:$0xff]
    %v1129 = vld [vmem:[#allocation3 + $0x188] sm:$0xff]
    %v1130 = vld [vmem:[#allocation3 + $0x190] sm:$0xff]
    %v1131 = vld [vmem:[#allocation3 + $0x198] sm:$0xff]
    %v1132 = vld [vmem:[#allocation3 + $0x1a0] sm:$0xff]
    %v1133 = vld [vmem:[#allocation3 + $0x1a8] sm:$0xff]
    %v1134 = vld [vmem:[#allocation3 + $0x1b0] sm:$0xff]
    %v1135 = vld [vmem:[#allocation3 + $0x1b8] sm:$0xff]
    %v1137 = vsel %vm248, %v1125, 0
    %1139 = vmatprep.subr.mxu0 %v1129
    %1140 = vmatpush1.msra.mxu0 %v1128
    %1141 = vmatprep.subr.mxu0 %v1131
    %1142 = vmatpush1.msra.mxu0 %v1130
    %1143 = vmatprep.subr.mxu0 %v1133
    %1144 = vmatpush1.msra.mxu0 %v1132
    %1145 = vmatprep.subr.mxu0 %v1135
    %1146 = vmatpush1.msra.mxu0 %v1134
    %1147 = vmatprep.subr.mxu0 0.0
    %1148 = vmatpush1.msra.mxu0 0.0
    %1149 = vmatprep.subr.mxu0 0.0
    %1150 = vmatpush1.msra.mxu0 0.0
    %1151 = vmatprep.subr.mxu0 0.0
    %1152 = vmatpush1.msra.mxu0 0.0
    %1153 = vmatprep.subr.mxu0 0.0
    %1154 = vmatpush1.msra.mxu0 0.0
    %1155 = vmatprep.subr.mxu0 0.0
    %1156 = vmatpush1.msra.mxu0 0.0
    %1157 = vmatprep.subr.mxu0 0.0
    %1158 = vmatpush1.msra.mxu0 0.0
    %1159 = vmatprep.subr.mxu0 0.0
    %1160 = vmatpush1.msra.mxu0 0.0
    %1161 = vmatprep.subr.mxu0 0.0
    %1162 = vmatpush1.msra.mxu0 0.0
    %1163 = vmatprep.subr.mxu0 0.0
    %1164 = vmatpush1.msra.mxu0 0.0
    %1165 = vmatprep.subr.mxu0 0.0
    %1166 = vmatpush1.msra.mxu0 0.0
    %1167 = vmatprep.subr.mxu0 0.0
    %1168 = vmatpush1.msra.mxu0 0.0
    %1169 = vmatprep.subr.mxu0 0.0
    %1170 = vmatpush1.msra.mxu0 0.0
    %1171 = vmatprep.subr.mxu0 0.0
    %1172 = vmatpush1.msra.mxu0 0.0
    %1173 = vmatprep.subr.mxu0 0.0
    %1174 = vmatpush1.msra.mxu0 0.0
    %1175 = vmatprep.subr.mxu0 0.0
    %1176 = vmatpush1.msra.mxu0 0.0
    %1177 = vmatprep.subr.mxu0 0.0
    %1178 = vmatpush1.msra.mxu0 0.0
    %1179 = vmatprep.subr.mxu0 0.0
    %1180 = vmatpush1.msra.mxu0 0.0
    %1181 = vmatprep.subr.mxu0 0.0
    %1182 = vmatpush1.msra.mxu0 0.0
    %1183 = vmatprep.subr.mxu0 0.0
    %1184 = vmatpush1.msra.mxu0 0.0
    %1185 = vmatprep.subr.mxu0 0.0
    %1186 = vmatpush1.msra.mxu0 0.0
    %1187 = vmatprep.subr.mxu0 0.0
    %1188 = vmatpush1.msra.mxu0 0.0
    %1189 = vmatprep.subr.mxu0 0.0
    %1190 = vmatpush1.msra.mxu0 0.0
    %1191 = vmatprep.subr.mxu0 0.0
    %1192 = vmatpush1.msra.mxu0 0.0
    %1193 = vmatprep.subr.mxu0 0.0
    %1194 = vmatpush1.msra.mxu0 0.0
    %1195 = vmatprep.subr.mxu0 0.0
    %1196 = vmatpush1.msra.mxu0 0.0
    %1197 = vmatprep.subr.mxu0 0.0
    %1198 = vmatpush1.msra.mxu0 0.0
    %1199 = vmatprep.subr.mxu0 0.0
    %1200 = vmatpush1.msra.mxu0 0.0
    %1201 = vmatprep.subr.mxu0 0.0
    %1202 = vmatpush1.msra.mxu0 0.0
    %1203 = vmatprep.mubr.f32.mxu0 0.0
    %1204 = vmatmul.mubr.f32.gmra.mrb[0].mxu0 %v1137
    %v1205 = vpop.f32.mrb[0].mxu0
    %v1206 = vadd.f32 0.0, %v1205
    %v1207 = vpop.f32.mrb[0].mxu0
    %v1208 = vadd.f32 0.0, %v1207
    %1209 = vdwg.mxu0
    %v1210 = vadd.f32 %v1047, %v1206
    %v1211 = vadd.f32 %v1048, %v1208
    %1212 = vset.pattern.permute.xlu0 7
    %1213 = vperm.xlu0 %1212, %v41
    %v1214 = vpop.permute.xlu0 %1213
    %vm1215 = vcmp.eq.s32.totalorder %v39, %v1214
    %vm1216 = vcmp.eq.s32.totalorder %v40, %v1214
    %v1217 = vsel %vm1215, 1, 0
    %v1218 = vsel %vm1216, 1, 0
    %v1219 = vcvt.s32.f32 %v1217
    %v1220 = vcvt.s32.f32 %v1218
    %1221 = vmatprep.subr.mxu0 0.0
    %1222 = vmatpush1.msra.mxu0 %v51
    %1223 = vmatprep.subr.mxu0 0.0
    %1224 = vmatpush1.msra.mxu0 %v52
    %1225 = vmatprep.subr.mxu0 0.0
    %1226 = vmatpush1.msra.mxu0 %v53
    %1227 = vmatprep.subr.mxu0 0.0
    %1228 = vmatpush1.msra.mxu0 %v54
    %1229 = vmatprep.subr.mxu0 0.0
    %1230 = vmatpush1.msra.mxu0 %v55
    %1231 = vmatprep.subr.mxu0 0.0
    %1232 = vmatpush1.msra.mxu0 %v56
    %1233 = vmatprep.subr.mxu0 0.0
    %1234 = vmatpush1.msra.mxu0 %v57
    %1235 = vmatprep.subr.mxu0 0.0
    %1236 = vmatpush1.msra.mxu0 %v58
    %1237 = vmatprep.subr.mxu0 0.0
    %1238 = vmatpush1.msra.mxu0 %v59
    %1239 = vmatprep.subr.mxu0 0.0
    %1240 = vmatpush1.msra.mxu0 %v60
    %1241 = vmatprep.subr.mxu0 0.0
    %1242 = vmatpush1.msra.mxu0 %v61
    %1243 = vmatprep.subr.mxu0 0.0
    %1244 = vmatpush1.msra.mxu0 %v62
    %1245 = vmatprep.subr.mxu0 0.0
    %1246 = vmatpush1.msra.mxu0 %v63
    %1247 = vmatprep.subr.mxu0 0.0
    %1248 = vmatpush1.msra.mxu0 %v64
    %1249 = vmatprep.subr.mxu0 0.0
    %1250 = vmatpush1.msra.mxu0 %v65
    %1251 = vmatprep.subr.mxu0 0.0
    %1252 = vmatpush1.msra.mxu0 %v66
    %1253 = vmatprep.subr.mxu0 0.0
    %1254 = vmatpush1.msra.mxu0 %v67
    %1255 = vmatprep.subr.mxu0 0.0
    %1256 = vmatpush1.msra.mxu0 %v68
    %1257 = vmatprep.subr.mxu0 0.0
    %1258 = vmatpush1.msra.mxu0 %v69
    %1259 = vmatprep.subr.mxu0 0.0
    %1260 = vmatpush1.msra.mxu0 %v70
    %1261 = vmatprep.subr.mxu0 0.0
    %1262 = vmatpush1.msra.mxu0 %v71
    %1263 = vmatprep.subr.mxu0 0.0
    %1264 = vmatpush1.msra.mxu0 %v72
    %1265 = vmatprep.subr.mxu0 0.0
    %1266 = vmatpush1.msra.mxu0 %v73
    %1267 = vmatprep.subr.mxu0 0.0
    %1268 = vmatpush1.msra.mxu0 %v74
    %1269 = vmatprep.subr.mxu0 0.0
    %1270 = vmatpush1.msra.mxu0 %v75
    %1271 = vmatprep.subr.mxu0 0.0
    %1272 = vmatpush1.msra.mxu0 %v76
    %1273 = vmatprep.subr.mxu0 0.0
    %1274 = vmatpush1.msra.mxu0 %v77
    %1275 = vmatprep.subr.mxu0 0.0
    %1276 = vmatpush1.msra.mxu0 %v78
    %1277 = vmatprep.subr.mxu0 0.0
    %1278 = vmatpush1.msra.mxu0 %v79
    %1279 = vmatprep.subr.mxu0 0.0
    %1280 = vmatpush1.msra.mxu0 %v80
    %1281 = vmatprep.subr.mxu0 0.0
    %1282 = vmatpush1.msra.mxu0 %v81
    %1283 = vmatprep.subr.mxu0 0.0
    %1284 = vmatpush1.msra.mxu0 %v82
    %1285 = vmatprep.mubr.f32.mxu0 %v1220
    %1286 = vmatmul.mubr.f32.gmra.mrb[0].mxu0 %v1219
    %v1287 = vpop.f32.mrb[0].mxu0
    %v1288 = vadd.f32 0.0, %v1287
    %v1289 = vpop.f32.mrb[0].mxu0
    %1290 = vdwg.mxu0
    %v1291 = vld [vmem:[#allocation3 + $0x1c0] sm:$0xff]
    %v1292 = vld [vmem:[#allocation3 + $0x1c8] sm:$0xff]
    %v1293 = vld [vmem:[#allocation3 + $0x1d0] sm:$0xff]
    %v1294 = vld [vmem:[#allocation3 + $0x1d8] sm:$0xff]
    %v1295 = vld [vmem:[#allocation3 + $0x1e0] sm:$0xff]
    %v1296 = vld [vmem:[#allocation3 + $0x1e8] sm:$0xff]
    %v1297 = vld [vmem:[#allocation3 + $0x1f0] sm:$0xff]
    %v1298 = vld [vmem:[#allocation3 + $0x1f8] sm:$0xff]
    %v1300 = vsel %vm248, %v1288, 0
    %1302 = vmatprep.subr.mxu0 %v1292
    %1303 = vmatpush1.msra.mxu0 %v1291
    %1304 = vmatprep.subr.mxu0 %v1294
    %1305 = vmatpush1.msra.mxu0 %v1293
    %1306 = vmatprep.subr.mxu0 %v1296
    %1307 = vmatpush1.msra.mxu0 %v1295
    %1308 = vmatprep.subr.mxu0 %v1298
    %1309 = vmatpush1.msra.mxu0 %v1297
    %1310 = vmatprep.subr.mxu0 0.0
    %1311 = vmatpush1.msra.mxu0 0.0
    %1312 = vmatprep.subr.mxu0 0.0
    %1313 = vmatpush1.msra.mxu0 0.0
    %1314 = vmatprep.subr.mxu0 0.0
    %1315 = vmatpush1.msra.mxu0 0.0
    %1316 = vmatprep.subr.mxu0 0.0
    %1317 = vmatpush1.msra.mxu0 0.0
    %1318 = vmatprep.subr.mxu0 0.0
    %1319 = vmatpush1.msra.mxu0 0.0
    %1320 = vmatprep.subr.mxu0 0.0
    %1321 = vmatpush1.msra.mxu0 0.0
    %1322 = vmatprep.subr.mxu0 0.0
    %1323 = vmatpush1.msra.mxu0 0.0
    %1324 = vmatprep.subr.mxu0 0.0
    %1325 = vmatpush1.msra.mxu0 0.0
    %1326 = vmatprep.subr.mxu0 0.0
    %1327 = vmatpush1.msra.mxu0 0.0
    %1328 = vmatprep.subr.mxu0 0.0
    %1329 = vmatpush1.msra.mxu0 0.0
    %1330 = vmatprep.subr.mxu0 0.0
    %1331 = vmatpush1.msra.mxu0 0.0
    %1332 = vmatprep.subr.mxu0 0.0
    %1333 = vmatpush1.msra.mxu0 0.0
    %1334 = vmatprep.subr.mxu0 0.0
    %1335 = vmatpush1.msra.mxu0 0.0
    %1336 = vmatprep.subr.mxu0 0.0
    %1337 = vmatpush1.msra.mxu0 0.0
    %1338 = vmatprep.subr.mxu0 0.0
    %1339 = vmatpush1.msra.mxu0 0.0
    %1340 = vmatprep.subr.mxu0 0.0
    %1341 = vmatpush1.msra.mxu0 0.0
    %1342 = vmatprep.subr.mxu0 0.0
    %1343 = vmatpush1.msra.mxu0 0.0
    %1344 = vmatprep.subr.mxu0 0.0
    %1345 = vmatpush1.msra.mxu0 0.0
    %1346 = vmatprep.subr.mxu0 0.0
    %1347 = vmatpush1.msra.mxu0 0.0
    %1348 = vmatprep.subr.mxu0 0.0
    %1349 = vmatpush1.msra.mxu0 0.0
    %1350 = vmatprep.subr.mxu0 0.0
    %1351 = vmatpush1.msra.mxu0 0.0
    %1352 = vmatprep.subr.mxu0 0.0
    %1353 = vmatpush1.msra.mxu0 0.0
    %1354 = vmatprep.subr.mxu0 0.0
    %1355 = vmatpush1.msra.mxu0 0.0
    %1356 = vmatprep.subr.mxu0 0.0
    %1357 = vmatpush1.msra.mxu0 0.0
    %1358 = vmatprep.subr.mxu0 0.0
    %1359 = vmatpush1.msra.mxu0 0.0
    %1360 = vmatprep.subr.mxu0 0.0
    %1361 = vmatpush1.msra.mxu0 0.0
    %1362 = vmatprep.subr.mxu0 0.0
    %1363 = vmatpush1.msra.mxu0 0.0
    %1364 = vmatprep.subr.mxu0 0.0
    %1365 = vmatpush1.msra.mxu0 0.0
    %1366 = vmatprep.mubr.f32.mxu0 0.0
    %1367 = vmatmul.mubr.f32.gmra.mrb[0].mxu0 %v1300
    %v1368 = vpop.f32.mrb[0].mxu0
    %v1369 = vadd.f32 0.0, %v1368
    %v1370 = vpop.f32.mrb[0].mxu0
    %v1371 = vadd.f32 0.0, %v1370
    %1372 = vdwg.mxu0
    %v1373 = vadd.f32 %v1210, %v1369
    %v1374 = vadd.f32 %v1211, %v1371
    %v1375 = vld [vmem:[%s3] sm:$0x3]
    %v1377 = vlaneseq
    %v1378 = vshrl.u32 %v1377, 7
    %v1379 = vsub.s32 0, %v1378
    %v1380 = vrot.slane %v1375, %v1379
    %v1381 = vlaneseq
    %v1382 = vshrl.u32 %v1381, 7
    %v1383 = vsub.s32 1, %v1382
    %v1384 = vrot.slane %v1375, %v1383
    %v1387 = vadd.f32 %v1373, %v1380
    %v1388 = vadd.f32 %v1374, %v1384
    %v1389 = vld [vmem:[%s4] sm:$0x3]
    %v1391 = vlaneseq
    %v1392 = vshrl.u32 %v1391, 7
    %v1393 = vsub.s32 0, %v1392
    %v1394 = vrot.slane %v1389, %v1393
    %v1395 = vlaneseq
    %v1396 = vshrl.u32 %v1395, 7
    %v1397 = vsub.s32 1, %v1396
    %v1398 = vrot.slane %v1389, %v1397
    %v1401 = vmul.f32 %v1387, %v1394
    %v1402 = vmul.f32 %v1388, %v1398
    %vm1403 = vcmask 1041408
    %v1404 = vsel %vm1403, %v1401, 0.0
    %v1405 = vsel %vm1403, %v1402, 0.0
    %v1406 = vadd.f32 %v1404, %v1405
    %1407 = vadd.xlane.f32.xlu0 %v1406
    %v1408 = vpop.xlane.xlu0 %1407
    %s1409 = sld [smem:[#allocation2]]
    %v1410 = vstv %s1409
    %v1411 = vadd.f32 %v1408, %v1410
    %v1412 = vxor.u32 %v1411, 2147483648
    %v1413 = vmul.f32 %v1412, 1.442695
    %v1414 = vpow.pop %v1413
    %v1415 = vadd.f32 %v1414, 1.0
    %v1416 = vrcp.pop %v1415
    %v1417 = vmul.f32 1.0, %v1416
    %v1418 = vmul.f32 %v1417, 9.0
    %v1419 = vadd.f32 %v1418, 1.0
    %vm1420 = vcmask 1024
    %1421 = vst.msk [vmem:[%s6] sm:$0x3] %vm1420, %v1419
    // Predicated region
    $region30: #{regression_forward.1} parent=1 // pred_check
      _
    $region31: #{regression_forward.1} parent=1 // pred_check_branch
      %1423 = sbr.rel (0) target = $region33
    $region32: #{regression_forward.1} parent=1 // pred_region
      _
    $region33: #{regression_forward.1} parent=1 // pred_fallthru
      _
    // Predicated region
    $region34: #{regression_forward.1} parent=1 // pred_check
      _
    $region35: #{regression_forward.1} parent=1 // pred_check_branch
      %1425 = sbr.rel (0) target = $region37
    $region36: #{regression_forward.1} parent=1 // pred_region
      _
    $region37: #{regression_forward.1} parent=1 // pred_fallthru
      _
    %1426 = vsyncpa [#allocation4], 1

</llo_original>
